<compile_context>
chip_gen: v7x
topology: tpu7x:2x2x1
jax: 0.10.0
libtpu: 0.0.40
codegen_flags: <defaults>
</compile_context>

<pallas_src>
import functools

import jax
import jax.numpy as jnp
from jax.experimental import pallas as pl
from jax.experimental.pallas import tpu as pltpu

# ----------------------------------------------------------------------------
# Op table (mirrors OPS in the PyTorch code)
# ----------------------------------------------------------------------------
OPS = {
    "conv3x3":      dict(kind="normal", k=3, p=1),
    "conv5x5":      dict(kind="normal", k=5, p=2),
    "conv7x7":      dict(kind="normal", k=7, p=3),
    "mbconv3x3_e1": dict(kind="sep", k=3, p=1, e=1),
    "mbconv3x3_e2": dict(kind="sep", k=3, p=1, e=2),
    "mbconv5x5_e1": dict(kind="sep", k=5, p=2, e=1),
    "mbconv5x5_e2": dict(kind="sep", k=5, p=2, e=2),
}

BN_EPS = 1e-5
LANE = 128


def _round_up(x, m):
    return (x + m - 1) // m * m


def _conv_out_dim(size, k, pad, stride):
    return (size + 2 * pad - k) // stride + 1


def _bn_fold(conv_bias, gamma, beta, mean, var, eps=BN_EPS):
    scale = gamma / jnp.sqrt(var + eps)
    bias = (conv_bias - mean) * scale + beta
    return scale, bias


# ----------------------------------------------------------------------------
# Kernel 1: NormalConvBlock  (kxk conv + BN + ReLU; one image per grid step;
#           in-VMEM zero-pad -> im2col -> single MXU GEMM -> BN/ReLU -> store)
# ----------------------------------------------------------------------------
def _normal_conv_kernel(x_ref, w_ref, s_ref, b_ref, o_ref, xp_ref, col_ref,
                        *, k, pad, stride, H, W, Cin, Ho, Wo):
    # x_ref : (1, H, W, Cin)        un-padded input image
    # w_ref : (k*k*Cin, Cp) bf16    im2col weight, Cout zero-padded to Cp lanes
    # s_ref, b_ref : (1, Cp) f32    folded BN scale / bias (zero in pad lanes)
    # o_ref : (1, Ho, Wo, Cp)       strided conv output (lane-dense)
    # xp_ref : VMEM (Hp, Wp, Cin) f32   zero-padded image
    # col_ref: VMEM (Ho, Wo, k*k*Cin) f32  im2col buffer
    Hp, Wp = H + 2 * pad, W + 2 * pad
    f32 = jnp.float32
    Cp = o_ref.shape[-1]

    # Zero-padded image in VMEM: one bulk interior copy + thin border zeroing.
    xp_ref[pad:pad + H, pad:pad + W, :] = x_ref[0].astype(f32)
    if pad > 0:
        xp_ref[0:pad, :, :] = jnp.zeros((pad, Wp, Cin), f32)
        xp_ref[pad + H:Hp, :, :] = jnp.zeros((pad, Wp, Cin), f32)
        xp_ref[pad:pad + H, 0:pad, :] = jnp.zeros((H, pad, Cin), f32)
        xp_ref[pad:pad + H, pad + W:Wp, :] = jnp.zeros((H, pad, Cin), f32)

    # im2col: one (Ho, Wo, Cin) block copy per tap (k*k copies per image).
    for kh in range(k):
        for kw in range(k):
            t = kh * k + kw
            if stride == 1:
                tap = xp_ref[kh:kh + Ho, kw:kw + Wo, :]
            else:
                # Stride folded into the gather (strided reads, one per row).
                rows = [
                    xp_ref[oh * stride + kh, pl.ds(kw, Wo, stride=stride), :][None]
                    for oh in range(Ho)
                ]
                tap = jnp.concatenate(rows, axis=0)
            col_ref[:, :, t * Cin:(t + 1) * Cin] = tap

    # One GEMM over all output positions: bf16 MXU operands, f32 accumulation.
    col = col_ref[...].reshape(Ho * Wo, k * k * Cin).astype(jnp.bfloat16)
    acc = jnp.dot(col, w_ref[...], preferred_element_type=f32)      # (Ho*Wo, Cp)
    y = jnp.maximum(acc * s_ref[...] + b_ref[...], 0.0)             # BN + ReLU
    o_ref[0] = y.reshape(Ho, Wo, Cp).astype(o_ref.dtype)


def normal_conv_block(x_nhwc, p, *, k, stride, padding):
    N, H, W, Cin = x_nhwc.shape
    Cout = p["w"].shape[0]
    Cp = _round_up(max(Cout, LANE), LANE)
    Ho = _conv_out_dim(H, k, padding, stride)
    Wo = _conv_out_dim(W, k, padding, stride)
    Hp, Wp = H + 2 * padding, W + 2 * padding
    KK = k * k * Cin

    # (Cout, Cin, k, k) -> im2col weight (k*k*Cin, Cp): row = (kh*k+kw)*Cin+ci.
    w = jnp.transpose(p["w"], (2, 3, 1, 0)).reshape(KK, Cout)
    w = jnp.pad(w, ((0, 0), (0, Cp - Cout))).astype(jnp.bfloat16)
    scale, bias = _bn_fold(p["b"], p["gamma"], p["beta"], p["mean"], p["var"])
    s2 = jnp.pad(scale, (0, Cp - Cout)).reshape(1, Cp).astype(jnp.float32)
    b2 = jnp.pad(bias, (0, Cp - Cout)).reshape(1, Cp).astype(jnp.float32)

    out = pl.pallas_call(
        functools.partial(_normal_conv_kernel, k=k, pad=padding, stride=stride,
                          H=H, W=W, Cin=Cin, Ho=Ho, Wo=Wo),
        out_shape=jax.ShapeDtypeStruct((N, Ho, Wo, Cp), x_nhwc.dtype),
        grid_spec=pltpu.PrefetchScalarGridSpec(
            num_scalar_prefetch=0,
            grid=(N,),
            in_specs=[
                pl.BlockSpec((1, H, W, Cin), lambda n: (n, 0, 0, 0)),
                pl.BlockSpec((KK, Cp), lambda n: (0, 0)),
                pl.BlockSpec((1, Cp), lambda n: (0, 0)),
                pl.BlockSpec((1, Cp), lambda n: (0, 0)),
            ],
            out_specs=pl.BlockSpec((1, Ho, Wo, Cp), lambda n: (n, 0, 0, 0)),
            scratch_shapes=[pltpu.VMEM((Hp, Wp, Cin), jnp.float32),
                            pltpu.VMEM((Ho, Wo, KK), jnp.float32)],
        ),
        compiler_params=pltpu.CompilerParams(dimension_semantics=("parallel",)),
    )(x_nhwc, w, s2, b2)
    return out                                   # lane-padded (N, Ho, Wo, Cp)


# ----------------------------------------------------------------------------
# Kernel 2: SeparableConvBlock — expand(1x1)+BN0 -> depthwise(kxk)+BN1+ReLU ->
#           project(1x1)+BN2, fully fused in a single pallas_call per image.
# ----------------------------------------------------------------------------
def _sep_conv_kernel(x_ref, we_ref, se_ref, be_ref, wd_ref, sd_ref, bd_ref,
                     wp_ref, sp_ref, bp_ref, o_ref, exp_ref,
                     *, k, pad, stride, H, W, Cin, Ho, Wo, has_expand):
    # x_ref : (1, H, W, Cin)            un-padded input image
    # we_ref: (Cin, Ep) bf16            1x1 expand weight (unused when e == 1)
    # se/be : (1, Ep) f32               folded BN0 scale / bias
    # wd_ref: (k*k, Ep) f32             depthwise weight per tap
    # sd/bd : (1, Ep) f32               folded BN1 scale / bias
    # wp_ref: (Ep, Cp) bf16             1x1 project weight
    # sp/bp : (1, Cp) f32               folded BN2 scale / bias
    # o_ref : (1, Ho, Wo, Cp)           strided output (lane-dense)
    # exp_ref: VMEM (Hp, Wp, Ep) f32    expanded, zero-padded feature map
    Hp, Wp = H + 2 * pad, W + 2 * pad
    Ep = exp_ref.shape[-1]
    Cp = o_ref.shape[-1]
    f32 = jnp.float32

    # ---- stage 1: 1x1 expand + BN0 as ONE flattened GEMM (M = H*W), written
    #      into the interior of the padded map.  For expand_ratio == 1 there is
    #      no expand conv: copy the input and zero the padding lanes instead.
    if has_expand:
        x2 = x_ref[0].reshape(H * W, Cin).astype(jnp.bfloat16)
        e = jnp.dot(x2, we_ref[...], preferred_element_type=f32)     # (H*W, Ep)
        e = e * se_ref[...] + be_ref[...]
        exp_ref[pad:pad + H, pad:pad + W, :] = e.reshape(H, W, Ep)
    else:
        exp_ref[pad:pad + H, pad:pad + W, :] = jnp.zeros((H, W, Ep), f32)
        exp_ref[pad:pad + H, pad:pad + W, 0:Cin] = x_ref[0].astype(f32)

    # Thin border zeroing (interior was bulk-filled above).  Done every grid
    # step on purpose: with "parallel" semantics each core has its own scratch.
    if pad > 0:
        exp_ref[0:pad, :, :] = jnp.zeros((pad, Wp, Ep), f32)
        exp_ref[pad + H:Hp, :, :] = jnp.zeros((pad, Wp, Ep), f32)
        exp_ref[pad:pad + H, 0:pad, :] = jnp.zeros((H, pad, Ep), f32)
        exp_ref[pad:pad + H, pad + W:Wp, :] = jnp.zeros((H, pad, Ep), f32)

    # ---- stage 2: depthwise kxk + BN1 + ReLU over the whole image (VPU, f32).
    acc = jnp.zeros((Ho, Wo, Ep), f32)
    for kh in range(k):
        for kw in range(k):
            t = kh * k + kw
            if stride == 1:
                tap = exp_ref[kh:kh + Ho, kw:kw + Wo, :]
            else:
                rows = [
                    exp_ref[oh * stride + kh, pl.ds(kw, Wo, stride=stride), :][None]
                    for oh in range(Ho)
                ]
                tap = jnp.concatenate(rows, axis=0)
            acc = acc + tap * wd_ref[t:t + 1, :]
    h = jnp.maximum(acc * sd_ref[...] + bd_ref[...], 0.0)

    # ---- stage 3: 1x1 project + BN2 as ONE flattened GEMM (M = Ho*Wo).
    h2 = h.reshape(Ho * Wo, Ep).astype(jnp.bfloat16)
    y = jnp.dot(h2, wp_ref[...], preferred_element_type=f32)         # (Ho*Wo, Cp)
    y = y * sp_ref[...] + bp_ref[...]                                # BN2, no ReLU
    o_ref[0] = y.reshape(Ho, Wo, Cp).astype(o_ref.dtype)


def separable_conv_block(x_nhwc, params, *, k, stride, padding, expand_ratio):
    N, H, W, Cin = x_nhwc.shape
    pd, pp = params["dw"], params["project"]
    oup = pd["w"].shape[0]
    Cout = pp["w"].shape[0]
    Ep = _round_up(max(oup, LANE), LANE)
    Cp = _round_up(max(Cout, LANE), LANE)
    Ho = _conv_out_dim(H, k, padding, stride)
    Wo = _conv_out_dim(W, k, padding, stride)
    Hp, Wp = H + 2 * padding, W + 2 * padding
    has_expand = expand_ratio != 1

    if has_expand:
        pe = params["expand"]
        we = pe["w"][:, :, 0, 0].T                                   # (Cin, oup)
        se, be = _bn_fold(pe["b"], pe["gamma"], pe["beta"], pe["mean"], pe["var"])
        we_p = jnp.pad(we, ((0, 0), (0, Ep - oup))).astype(jnp.bfloat16)
        se_p = jnp.pad(se, (0, Ep - oup)).reshape(1, Ep).astype(jnp.float32)
        be_p = jnp.pad(be, (0, Ep - oup)).reshape(1, Ep).astype(jnp.float32)
    else:
        # No expand stage in the module: tiny dummy operands (never read).
        we_p = jnp.zeros((Cin, Ep), jnp.bfloat16)
        se_p = jnp.zeros((1, Ep), jnp.float32)
        be_p = jnp.zeros((1, Ep), jnp.float32)

    wd = pd["w"].reshape(oup, k * k).T                               # (k*k, oup)
    wd_p = jnp.pad(wd, ((0, 0), (0, Ep - oup))).astype(jnp.float32)
    sd, bd = _bn_fold(pd["b"], pd["gamma"], pd["beta"], pd["mean"], pd["var"])
    sd_p = jnp.pad(sd, (0, Ep - oup)).reshape(1, Ep).astype(jnp.float32)
    bd_p = jnp.pad(bd, (0, Ep - oup)).reshape(1, Ep).astype(jnp.float32)

    wpj = pp["w"][:, :, 0, 0].T                                      # (oup, Cout)
    wpj_p = jnp.pad(wpj, ((0, Ep - oup), (0, Cp - Cout))).astype(jnp.bfloat16)
    sp, bp = _bn_fold(pp["b"], pp["gamma"], pp["beta"], pp["mean"], pp["var"])
    sp_p = jnp.pad(sp, (0, Cp - Cout)).reshape(1, Cp).astype(jnp.float32)
    bp_p = jnp.pad(bp, (0, Cp - Cout)).reshape(1, Cp).astype(jnp.float32)

    out = pl.pallas_call(
        functools.partial(_sep_conv_kernel, k=k, pad=padding, stride=stride,
                          H=H, W=W, Cin=Cin, Ho=Ho, Wo=Wo, has_expand=has_expand),
        out_shape=jax.ShapeDtypeStruct((N, Ho, Wo, Cp), x_nhwc.dtype),
        grid_spec=pltpu.PrefetchScalarGridSpec(
            num_scalar_prefetch=0,
            grid=(N,),
            in_specs=[
                pl.BlockSpec((1, H, W, Cin), lambda n: (n, 0, 0, 0)),
                pl.BlockSpec((Cin, Ep), lambda n: (0, 0)),
                pl.BlockSpec((1, Ep), lambda n: (0, 0)),
                pl.BlockSpec((1, Ep), lambda n: (0, 0)),
                pl.BlockSpec((k * k, Ep), lambda n: (0, 0)),
                pl.BlockSpec((1, Ep), lambda n: (0, 0)),
                pl.BlockSpec((1, Ep), lambda n: (0, 0)),
                pl.BlockSpec((Ep, Cp), lambda n: (0, 0)),
                pl.BlockSpec((1, Cp), lambda n: (0, 0)),
                pl.BlockSpec((1, Cp), lambda n: (0, 0)),
            ],
            out_specs=pl.BlockSpec((1, Ho, Wo, Cp), lambda n: (n, 0, 0, 0)),
            scratch_shapes=[pltpu.VMEM((Hp, Wp, Ep), jnp.float32)],
        ),
        compiler_params=pltpu.CompilerParams(dimension_semantics=("parallel",)),
    )(x_nhwc, we_p, se_p, be_p, wd_p, sd_p, bd_p, wpj_p, sp_p, bp_p)
    return out                                   # lane-padded (N, Ho, Wo, Cp)


# ----------------------------------------------------------------------------
# Parameter initialization (deterministic, synthetic; matches module structure)
# ----------------------------------------------------------------------------
def _init_conv_bn(key, cin, cout, k):
    ks = jax.random.split(key, 6)
    fan_in = cin * k * k
    return dict(
        w=jax.random.normal(ks[0], (cout, cin, k, k), jnp.float32) / jnp.sqrt(fan_in),
        b=jax.random.normal(ks[1], (cout,), jnp.float32) * 0.1,
        gamma=jax.random.uniform(ks[2], (cout,), jnp.float32, 0.5, 1.5),
        beta=jax.random.normal(ks[3], (cout,), jnp.float32) * 0.1,
        mean=jax.random.normal(ks[4], (cout,), jnp.float32) * 0.1,
        var=jax.random.uniform(ks[5], (cout,), jnp.float32, 0.5, 1.5),
    )


def init_block_params(key, in_ch, out_ch, op_name):
    cfg = OPS[op_name]
    if cfg["kind"] == "normal":
        return dict(conv=_init_conv_bn(key, in_ch, out_ch, cfg["k"]))
    e = cfg["e"]
    oup = int(in_ch * e)
    keys = jax.random.split(key, 3)
    params = {}
    if e != 1:
        params["expand"] = _init_conv_bn(keys[0], in_ch, oup, 1)
    params["dw"] = _init_conv_bn(keys[1], 1, oup, cfg["k"])   # depthwise (oup,1,k,k)
    params["project"] = _init_conv_bn(keys[2], oup, out_ch, 1)
    return params


# ----------------------------------------------------------------------------
# Forward pass (mirrors Block.forward)
# ----------------------------------------------------------------------------
def block_forward(x_nchw, params, *, in_scale, out_scale, op_name):
    cfg = OPS[op_name]
    assert out_scale % in_scale == 0 or in_scale % out_scale == 0
    if out_scale >= in_scale:
        stride, upsample = out_scale // in_scale, 1
    else:
        stride, upsample = 1, in_scale // out_scale

    x = jnp.transpose(x_nchw, (0, 2, 3, 1))                     # NCHW -> NHWC
    if cfg["kind"] == "normal":
        Cout = params["conv"]["w"].shape[0]
        y = normal_conv_block(x, params["conv"], k=cfg["k"], stride=stride,
                              padding=cfg["p"])
    else:
        Cout = params["project"]["w"].shape[0]
        y = separable_conv_block(x, params, k=cfg["k"], stride=stride,
                                 padding=cfg["p"], expand_ratio=cfg["e"])
    if upsample > 1:
        # TODO(synk): fuse nearest upsample into the kernel output writeback.
        y = jnp.repeat(jnp.repeat(y, upsample, axis=1), upsample, axis=2)
    # Lane-padding slice + NHWC->NCHW transpose fuse into a single XLA pass.
    return jnp.transpose(y[..., :Cout], (0, 3, 1, 2))


# ----------------------------------------------------------------------------
# Pure-JAX reference (lax.conv, f32) for a correctness check
# ----------------------------------------------------------------------------
def _ref_block(x_nchw, params, *, in_scale, out_scale, op_name):
    cfg = OPS[op_name]
    stride = out_scale // in_scale if out_scale >= in_scale else 1

    def conv(x, w, b, s, p, groups=1):
        y = jax.lax.conv_general_dilated(
            x, w, (s, s), [(p, p), (p, p)],
            dimension_numbers=("NCHW", "OIHW", "NCHW"),
            feature_group_count=groups)
        return y + b.reshape(1, -1, 1, 1)

    def bn(x, pp):
        s = pp["gamma"] / jnp.sqrt(pp["var"] + BN_EPS)
        return x * s.reshape(1, -1, 1, 1) + (pp["beta"] - pp["mean"] * s).reshape(1, -1, 1, 1)

    if cfg["kind"] == "normal":
        p = params["conv"]
        y = jnp.maximum(bn(conv(x_nchw, p["w"], p["b"], stride, cfg["p"]), p), 0.0)
    else:
        out = x_nchw
        if cfg["e"] != 1:
            pe = params["expand"]
            out = bn(conv(out, pe["w"], pe["b"], 1, 0), pe)
        pd = params["dw"]
        oup = pd["w"].shape[0]
        out = jnp.maximum(bn(conv(out, pd["w"], pd["b"], stride, cfg["p"], groups=oup), pd), 0.0)
        pp = params["project"]
        y = bn(conv(out, pp["w"], pp["b"], 1, 0), pp)
    if out_scale < in_scale:
        r = in_scale // out_scale
        y = jnp.repeat(jnp.repeat(y, r, axis=2), r, axis=3)
    return y


# ----------------------------------------------------------------------------
if __name__ == "__main__":
    key = jax.random.PRNGKey(0)
    kx, kp1, kp2, kp3 = jax.random.split(key, 4)
    x = jax.random.normal(kx, (2, 4, 16, 16), jnp.float32)       # NCHW, small

    # Kernel GEMM operands are bf16 (f32 accumulation); reference is pure f32,
    # so the tolerance below accounts for bf16 rounding of the MXU inputs.
    ATOL = RTOL = 5e-2

    # Block(4, 8, in_scale=1, out_scale=1, 'conv3x3')
    p1 = init_block_params(kp1, 4, 8, "conv3x3")
    y1 = jax.block_until_ready(
        block_forward(x, p1, in_scale=1, out_scale=1, op_name="conv3x3"))
    r1 = _ref_block(x, p1, in_scale=1, out_scale=1, op_name="conv3x3")
    assert y1.shape == (2, 8, 16, 16)
    assert bool(jnp.allclose(y1, r1, atol=ATOL, rtol=RTOL)), \
        float(jnp.max(jnp.abs(y1 - r1)))

    # Block(4, 8, in_scale=1, out_scale=1, 'mbconv3x3_e2')
    p2 = init_block_params(kp2, 4, 8, "mbconv3x3_e2")
    y2 = jax.block_until_ready(
        block_forward(x, p2, in_scale=1, out_scale=1, op_name="mbconv3x3_e2"))
    r2 = _ref_block(x, p2, in_scale=1, out_scale=1, op_name="mbconv3x3_e2")
    assert y2.shape == (2, 8, 16, 16)
    assert bool(jnp.allclose(y2, r2, atol=ATOL, rtol=RTOL)), \
        float(jnp.max(jnp.abs(y2 - r2)))

    # Block(4, 8, in_scale=2, out_scale=1, 'mbconv5x5_e1')  (no expand + upsample)
    p3 = init_block_params(kp3, 4, 8, "mbconv5x5_e1")
    y3 = jax.block_until_ready(
        block_forward(x, p3, in_scale=2, out_scale=1, op_name="mbconv5x5_e1"))
    r3 = _ref_block(x, p3, in_scale=2, out_scale=1, op_name="mbconv5x5_e1")
    assert y3.shape == (2, 8, 32, 32)
    assert bool(jnp.allclose(y3, r3, atol=ATOL, rtol=RTOL)), \
        float(jnp.max(jnp.abs(y3 - r3)))

    print("KERNEL_OK")
</pallas_src>

<mosaic_0001>
module attributes {stable_mosaic.version = 11 : i64} {
  func.func @_normal_conv_kernel(%arg0: i32, %arg1: memref<1x16x16x4xf32, #tpu.memory_space<vmem>>, %arg2: memref<36x128xbf16, #tpu.memory_space<vmem>>, %arg3: memref<1x128xf32, #tpu.memory_space<vmem>>, %arg4: memref<1x128xf32, #tpu.memory_space<vmem>>, %arg5: memref<1x16x16x128xf32, #tpu.memory_space<vmem>>, %arg6: memref<18x18x4xf32, #tpu.memory_space<vmem>>, %arg7: memref<16x16x36xf32, #tpu.memory_space<vmem>>) attributes {dimension_semantics = [#tpu.dimension_semantics<parallel>], iteration_bounds = array<i64: 2>, scalar_prefetch = 0 : i64, scratch_operands = 2 : i64, tpu.core_type = #tpu.core_type<tc>, window_params = [{transform_indices = @transform_0, window_bounds = array<i64: 1, 16, 16, 4>}, {pipeline_mode = #tpu.pipeline_mode<synchronous>, transform_indices = @transform_1, window_bounds = array<i64: 36, 128>}, {pipeline_mode = #tpu.pipeline_mode<synchronous>, transform_indices = @transform_2, window_bounds = array<i64: 1, 128>}, {pipeline_mode = #tpu.pipeline_mode<synchronous>, transform_indices = @transform_3, window_bounds = array<i64: 1, 128>}, {transform_indices = @transform_4, window_bounds = array<i64: 1, 16, 16, 128>}]} {
    %c0 = arith.constant 0 : index
    %c0_0 = arith.constant 0 : index
    %c0_1 = arith.constant 0 : index
    %c0_2 = arith.constant 0 : index
    %0 = vector.load %arg1[%c0, %c0_0, %c0_1, %c0_2] : memref<1x16x16x4xf32, #tpu.memory_space<vmem>>, vector<1x16x16x4xf32>
    %1 = vector.shape_cast %0 : vector<1x16x16x4xf32> to vector<16x16x4xf32>
    %c1 = arith.constant 1 : index
    %c1_3 = arith.constant 1 : index
    %c0_4 = arith.constant 0 : index
    %2 = vector.load %arg6[%c1, %c1_3, %c0_4] : memref<18x18x4xf32, #tpu.memory_space<vmem>>, vector<16x16x4xf32>
    tpu.vector_store %arg6[%c1, %c1_3, %c0_4], %1 {strides = array<i32>} : memref<18x18x4xf32, #tpu.memory_space<vmem>>, vector<16x16x4xf32>,
    %cst = arith.constant 0.000000e+00 : f32
    %3 = vector.broadcast %cst : f32 to vector<1x18x4xf32>
    %c0_5 = arith.constant 0 : index
    %c0_6 = arith.constant 0 : index
    %c0_7 = arith.constant 0 : index
    %4 = vector.load %arg6[%c0_5, %c0_6, %c0_7] : memref<18x18x4xf32, #tpu.memory_space<vmem>>, vector<1x18x4xf32>
    tpu.vector_store %arg6[%c0_5, %c0_6, %c0_7], %3 {strides = array<i32>} : memref<18x18x4xf32, #tpu.memory_space<vmem>>, vector<1x18x4xf32>,
    %cst_8 = arith.constant 0.000000e+00 : f32
    %5 = vector.broadcast %cst_8 : f32 to vector<1x18x4xf32>
    %c17 = arith.constant 17 : index
    %c0_9 = arith.constant 0 : index
    %c0_10 = arith.constant 0 : index
    %6 = vector.load %arg6[%c17, %c0_9, %c0_10] : memref<18x18x4xf32, #tpu.memory_space<vmem>>, vector<1x18x4xf32>
    tpu.vector_store %arg6[%c17, %c0_9, %c0_10], %5 {strides = array<i32>} : memref<18x18x4xf32, #tpu.memory_space<vmem>>, vector<1x18x4xf32>,
    %cst_11 = arith.constant 0.000000e+00 : f32
    %7 = vector.broadcast %cst_11 : f32 to vector<16x1x4xf32>
    %c1_12 = arith.constant 1 : index
    %c0_13 = arith.constant 0 : index
    %c0_14 = arith.constant 0 : index
    %8 = vector.load %arg6[%c1_12, %c0_13, %c0_14] : memref<18x18x4xf32, #tpu.memory_space<vmem>>, vector<16x1x4xf32>
    tpu.vector_store %arg6[%c1_12, %c0_13, %c0_14], %7 {strides = array<i32>} : memref<18x18x4xf32, #tpu.memory_space<vmem>>, vector<16x1x4xf32>,
    %cst_15 = arith.constant 0.000000e+00 : f32
    %9 = vector.broadcast %cst_15 : f32 to vector<16x1x4xf32>
    %c1_16 = arith.constant 1 : index
    %c17_17 = arith.constant 17 : index
    %c0_18 = arith.constant 0 : index
    %10 = vector.load %arg6[%c1_16, %c17_17, %c0_18] : memref<18x18x4xf32, #tpu.memory_space<vmem>>, vector<16x1x4xf32>
    tpu.vector_store %arg6[%c1_16, %c17_17, %c0_18], %9 {strides = array<i32>} : memref<18x18x4xf32, #tpu.memory_space<vmem>>, vector<16x1x4xf32>,
    %c0_19 = arith.constant 0 : index
    %c0_20 = arith.constant 0 : index
    %c0_21 = arith.constant 0 : index
    %11 = vector.load %arg6[%c0_19, %c0_20, %c0_21] : memref<18x18x4xf32, #tpu.memory_space<vmem>>, vector<16x16x4xf32>
    %c0_22 = arith.constant 0 : index
    %c0_23 = arith.constant 0 : index
    %c0_24 = arith.constant 0 : index
    %12 = vector.load %arg7[%c0_22, %c0_23, %c0_24] : memref<16x16x36xf32, #tpu.memory_space<vmem>>, vector<16x16x4xf32>
    tpu.vector_store %arg7[%c0_22, %c0_23, %c0_24], %11 {strides = array<i32>} : memref<16x16x36xf32, #tpu.memory_space<vmem>>, vector<16x16x4xf32>,
    %c0_25 = arith.constant 0 : index
    %c1_26 = arith.constant 1 : index
    %c0_27 = arith.constant 0 : index
    %13 = vector.load %arg6[%c0_25, %c1_26, %c0_27] : memref<18x18x4xf32, #tpu.memory_space<vmem>>, vector<16x16x4xf32>
    %c0_28 = arith.constant 0 : index
    %c0_29 = arith.constant 0 : index
    %c4 = arith.constant 4 : index
    %14 = vector.load %arg7[%c0_28, %c0_29, %c4] : memref<16x16x36xf32, #tpu.memory_space<vmem>>, vector<16x16x4xf32>
    tpu.vector_store %arg7[%c0_28, %c0_29, %c4], %13 {strides = array<i32>} : memref<16x16x36xf32, #tpu.memory_space<vmem>>, vector<16x16x4xf32>,
    %c0_30 = arith.constant 0 : index
    %c2 = arith.constant 2 : index
    %c0_31 = arith.constant 0 : index
    %15 = vector.load %arg6[%c0_30, %c2, %c0_31] : memref<18x18x4xf32, #tpu.memory_space<vmem>>, vector<16x16x4xf32>
    %c0_32 = arith.constant 0 : index
    %c0_33 = arith.constant 0 : index
    %c8 = arith.constant 8 : index
    %16 = vector.load %arg7[%c0_32, %c0_33, %c8] : memref<16x16x36xf32, #tpu.memory_space<vmem>>, vector<16x16x4xf32>
    tpu.vector_store %arg7[%c0_32, %c0_33, %c8], %15 {strides = array<i32>} : memref<16x16x36xf32, #tpu.memory_space<vmem>>, vector<16x16x4xf32>,
    %c1_34 = arith.constant 1 : index
    %c0_35 = arith.constant 0 : index
    %c0_36 = arith.constant 0 : index
    %17 = vector.load %arg6[%c1_34, %c0_35, %c0_36] : memref<18x18x4xf32, #tpu.memory_space<vmem>>, vector<16x16x4xf32>
    %c0_37 = arith.constant 0 : index
    %c0_38 = arith.constant 0 : index
    %c12 = arith.constant 12 : index
    %18 = vector.load %arg7[%c0_37, %c0_38, %c12] : memref<16x16x36xf32, #tpu.memory_space<vmem>>, vector<16x16x4xf32>
    tpu.vector_store %arg7[%c0_37, %c0_38, %c12], %17 {strides = array<i32>} : memref<16x16x36xf32, #tpu.memory_space<vmem>>, vector<16x16x4xf32>,
    %c1_39 = arith.constant 1 : index
    %c1_40 = arith.constant 1 : index
    %c0_41 = arith.constant 0 : index
    %19 = vector.load %arg6[%c1_39, %c1_40, %c0_41] : memref<18x18x4xf32, #tpu.memory_space<vmem>>, vector<16x16x4xf32>
    %c0_42 = arith.constant 0 : index
    %c0_43 = arith.constant 0 : index
    %c16 = arith.constant 16 : index
    %20 = vector.load %arg7[%c0_42, %c0_43, %c16] : memref<16x16x36xf32, #tpu.memory_space<vmem>>, vector<16x16x4xf32>
    tpu.vector_store %arg7[%c0_42, %c0_43, %c16], %19 {strides = array<i32>} : memref<16x16x36xf32, #tpu.memory_space<vmem>>, vector<16x16x4xf32>,
    %c1_44 = arith.constant 1 : index
    %c2_45 = arith.constant 2 : index
    %c0_46 = arith.constant 0 : index
    %21 = vector.load %arg6[%c1_44, %c2_45, %c0_46] : memref<18x18x4xf32, #tpu.memory_space<vmem>>, vector<16x16x4xf32>
    %c0_47 = arith.constant 0 : index
    %c0_48 = arith.constant 0 : index
    %c20 = arith.constant 20 : index
    %22 = vector.load %arg7[%c0_47, %c0_48, %c20] : memref<16x16x36xf32, #tpu.memory_space<vmem>>, vector<16x16x4xf32>
    tpu.vector_store %arg7[%c0_47, %c0_48, %c20], %21 {strides = array<i32>} : memref<16x16x36xf32, #tpu.memory_space<vmem>>, vector<16x16x4xf32>,
    %c2_49 = arith.constant 2 : index
    %c0_50 = arith.constant 0 : index
    %c0_51 = arith.constant 0 : index
    %23 = vector.load %arg6[%c2_49, %c0_50, %c0_51] : memref<18x18x4xf32, #tpu.memory_space<vmem>>, vector<16x16x4xf32>
    %c0_52 = arith.constant 0 : index
    %c0_53 = arith.constant 0 : index
    %c24 = arith.constant 24 : index
    %24 = vector.load %arg7[%c0_52, %c0_53, %c24] : memref<16x16x36xf32, #tpu.memory_space<vmem>>, vector<16x16x4xf32>
    tpu.vector_store %arg7[%c0_52, %c0_53, %c24], %23 {strides = array<i32>} : memref<16x16x36xf32, #tpu.memory_space<vmem>>, vector<16x16x4xf32>,
    %c2_54 = arith.constant 2 : index
    %c1_55 = arith.constant 1 : index
    %c0_56 = arith.constant 0 : index
    %25 = vector.load %arg6[%c2_54, %c1_55, %c0_56] : memref<18x18x4xf32, #tpu.memory_space<vmem>>, vector<16x16x4xf32>
    %c0_57 = arith.constant 0 : index
    %c0_58 = arith.constant 0 : index
    %c28 = arith.constant 28 : index
    %26 = vector.load %arg7[%c0_57, %c0_58, %c28] : memref<16x16x36xf32, #tpu.memory_space<vmem>>, vector<16x16x4xf32>
    tpu.vector_store %arg7[%c0_57, %c0_58, %c28], %25 {strides = array<i32>} : memref<16x16x36xf32, #tpu.memory_space<vmem>>, vector<16x16x4xf32>,
    %c2_59 = arith.constant 2 : index
    %c2_60 = arith.constant 2 : index
    %c0_61 = arith.constant 0 : index
    %27 = vector.load %arg6[%c2_59, %c2_60, %c0_61] : memref<18x18x4xf32, #tpu.memory_space<vmem>>, vector<16x16x4xf32>
    %c0_62 = arith.constant 0 : index
    %c0_63 = arith.constant 0 : index
    %c32 = arith.constant 32 : index
    %28 = vector.load %arg7[%c0_62, %c0_63, %c32] : memref<16x16x36xf32, #tpu.memory_space<vmem>>, vector<16x16x4xf32>
    tpu.vector_store %arg7[%c0_62, %c0_63, %c32], %27 {strides = array<i32>} : memref<16x16x36xf32, #tpu.memory_space<vmem>>, vector<16x16x4xf32>,
    %c0_64 = arith.constant 0 : index
    %c0_65 = arith.constant 0 : index
    %c0_66 = arith.constant 0 : index
    %29 = vector.load %arg7[%c0_64, %c0_65, %c0_66] : memref<16x16x36xf32, #tpu.memory_space<vmem>>, vector<16x16x36xf32>
    %30 = vector.shape_cast %29 : vector<16x16x36xf32> to vector<256x36xf32>
    %31 = arith.truncf %30 : vector<256x36xf32> to vector<256x36xbf16>
    %c0_67 = arith.constant 0 : index
    %c0_68 = arith.constant 0 : index
    %32 = vector.load %arg2[%c0_67, %c0_68] : memref<36x128xbf16, #tpu.memory_space<vmem>>, vector<36x128xbf16>
    %cst_69 = arith.constant dense<0.000000e+00> : vector<256x128xf32>
    %33 = tpu.matmul %31, %32, %cst_69 {dimension_numbers = #tpu.dot_dimension_numbers<[1], [0], [0], [1], [0, 0, 1, 1], [], []>} : vector<256x36xbf16>, vector<36x128xbf16>, vector<256x128xf32> -> vector<256x128xf32>
    %c0_70 = arith.constant 0 : index
    %c0_71 = arith.constant 0 : index
    %34 = vector.load %arg3[%c0_70, %c0_71] : memref<1x128xf32, #tpu.memory_space<vmem>>, vector<1x128xf32>
    %35 = vector.broadcast %34 : vector<1x128xf32> to vector<256x128xf32>
    %36 = arith.mulf %33, %35 : vector<256x128xf32>
    %c0_72 = arith.constant 0 : index
    %c0_73 = arith.constant 0 : index
    %37 = vector.load %arg4[%c0_72, %c0_73] : memref<1x128xf32, #tpu.memory_space<vmem>>, vector<1x128xf32>
    %38 = vector.broadcast %37 : vector<1x128xf32> to vector<256x128xf32>
    %39 = arith.addf %36, %38 : vector<256x128xf32>
    %cst_74 = arith.constant 0.000000e+00 : f32
    %40 = vector.broadcast %cst_74 : f32 to vector<256x128xf32>
    %41 = arith.maximumf %39, %40 : vector<256x128xf32>
    %42 = vector.shape_cast %41 : vector<256x128xf32> to vector<16x16x128xf32>
    %c0_75 = arith.constant 0 : index
    %c0_76 = arith.constant 0 : index
    %c0_77 = arith.constant 0 : index
    %c0_78 = arith.constant 0 : index
    %43 = vector.load %arg5[%c0_75, %c0_76, %c0_77, %c0_78] : memref<1x16x16x128xf32, #tpu.memory_space<vmem>>, vector<1x16x16x128xf32>
    %44 = vector.shape_cast %43 : vector<1x16x16x128xf32> to vector<16x16x128xf32>
    %45 = vector.shape_cast %42 : vector<16x16x128xf32> to vector<1x16x16x128xf32>
    tpu.vector_store %arg5[%c0_75, %c0_76, %c0_77, %c0_78], %45 {strides = array<i32>} : memref<1x16x16x128xf32, #tpu.memory_space<vmem>>, vector<1x16x16x128xf32>,
    return
  }
  func.func @transform_0(%arg0: i32) -> (i32, i32, i32, i32) {
    %c0_i32 = arith.constant 0 : i32
    %c0_i32_0 = arith.constant 0 : i32
    %c0_i32_1 = arith.constant 0 : i32
    %c0_i32_2 = arith.constant 0 : i32
    return %arg0, %c0_i32, %c0_i32_0, %c0_i32_1 : i32, i32, i32, i32
  }
  func.func @transform_1(%arg0: i32) -> (i32, i32) {
    %c0_i32 = arith.constant 0 : i32
    %c0_i32_0 = arith.constant 0 : i32
    %c0_i32_1 = arith.constant 0 : i32
    return %c0_i32, %c0_i32_0 : i32, i32
  }
  func.func @transform_2(%arg0: i32) -> (i32, i32) {
    %c0_i32 = arith.constant 0 : i32
    %c0_i32_0 = arith.constant 0 : i32
    %c0_i32_1 = arith.constant 0 : i32
    return %c0_i32, %c0_i32_0 : i32, i32
  }
  func.func @transform_3(%arg0: i32) -> (i32, i32) {
    %c0_i32 = arith.constant 0 : i32
    %c0_i32_0 = arith.constant 0 : i32
    %c0_i32_1 = arith.constant 0 : i32
    return %c0_i32, %c0_i32_0 : i32, i32
  }
  func.func @transform_4(%arg0: i32) -> (i32, i32, i32, i32) {
    %c0_i32 = arith.constant 0 : i32
    %c0_i32_0 = arith.constant 0 : i32
    %c0_i32_1 = arith.constant 0 : i32
    %c0_i32_2 = arith.constant 0 : i32
    return %arg0, %c0_i32, %c0_i32_0, %c0_i32_1 : i32, i32, i32, i32
  }
}

</mosaic_0001>

<llo_original>
// kernel: tpu_custom_call.1
$region0: #{tpu_custom_call.1}
  #allocation0 [shape = 'u32[]', space=smem, size = 0x4, offset = 0x4, fixed_abs, tag = 'smem constant byte address 0x4 - core index']
  #allocation1 [shape = 'u32[144,128]{1,0:T(1,128)}', space=vmem, size = 0x12000, scoped, tag = 'internal scratch']
  #allocation2 [shape = 'f32[18,18,4]{2,1,0:T(8,128)}', space=vmem, size = 0x36000, scoped, tag = 'scratch operand']
  #allocation3 [shape = 'f32[16,16,36]{2,1,0:T(8,128)}', space=vmem, size = 0x20000, scoped, tag = 'scratch operand']
  %s0 = inlined_call_operand.vmem [shape: f32[2,16,16,4], index: 0, kind: input, shape index: {}]
  %s1 = inlined_call_operand.vmem [shape: bf16[36,128], index: 1, kind: input, shape index: {}]
  %s2 = inlined_call_operand.vmem [shape: f32[1,128], index: 2, kind: input, shape index: {}]
  %s3 = inlined_call_operand.vmem [shape: f32[1,128], index: 3, kind: input, shape index: {}]
  %s4 = inlined_call_operand.hbm [shape: f32[2,16,16,128], index: 4, kind: output, shape index: {}]
  %s5 = sld [smem:[#allocation0]]
  $region49: #{tpu_custom_call.1} parent=0
    _
  %s7 = ssub.s32 1, %s5
  %s8 = scalar_select 0, %s7, %s5
  $region1: #{tpu_custom_call.1} parent=0
    #allocation4 [shape = 'u8[262144]{0}', space=vmem, size = 0x40000, scoped, tag = 'output window, operand 0']
    #allocation5 [shape = 's32[2]{0}', space=sflag, size = 0x8, scoped, tag = 'scoped memory for tpu_custom_call.1']
    %9 = vsyncpa [#allocation5], 0
    %s10 = scalar_lea.sflag [#allocation5], 1
    %11 = vsyncpa %s10, 0
    loop: start=0, step=1, limit=4
    $region2: #{tpu_custom_call.1} parent=1 // loop_pre_header
      _
    $region3: #{tpu_custom_call.1} parent=1 // loop_header
      %s13 = sphi 0, %s17
      %p14 = scmp.ge.s32.totalorder %s13, 4
      %s23 = sphi 0, %s25
      %s26 = sphi 0, %s23
      %s27 = sphi 0, %s26
      %s43 = sphi 0, %s27
      %s47 = sphi 0, %s47
      %s49 = sphi 0, %s47
      %s50 = sphi 0, %s49
      %s64 = sphi 0, %s50
      %s68 = sphi 0, %s68
      %s70 = sphi 0, %s68
      %s71 = sphi 0, %s70
      %s85 = sphi 0, %s71
      %s89 = sphi 0, %s89
      %s91 = sphi 0, %s89
      %s92 = sphi 0, %s91
      %s106 = sphi 0, %s92
      %s112 = sphi 0, %s114
      %s115 = sphi 0, %s112
      %s116 = sphi 0, %s115
      %s132 = sphi 0, %s116
    $region4: #{tpu_custom_call.1} parent=1 // loop_header_branch
      %16 = sbr.rel (%p14) target = $region8
    $region5: #{tpu_custom_call.1} parent=1 // loop_body
      %s18 = ssub.s32 %s13, 1
      %s19 = ssub.s32 %s13, 2
      %s20 = sadd.s32 %s13, 1
      %s21 = ssub.s32 %s13, %s20
      %p22 = scmp.eq.s32.totalorder %s21, 0
      %s24 = sadd.s32 %s23, 1
      %s25 = scalar_select %p22, %s23, %s24
      %p28 = pneg %p22
      %p29 = scmp.eq.s32.totalorder %s13, 1
      %p30 = por %p28, %p29
      %p31 = scmp.ne.s32.totalorder %s23, %s26
      %p32 = scmp.eq.s32.totalorder %s13, 0
      %p33 = por %p31, %p32
      %p34 = scmp.ne.s32.totalorder %s23, %s26
      %p35 = scmp.eq.s32.totalorder %s18, 1
      %p36 = por %p34, %p35
      %p37 = scmp.ne.s32.totalorder %s26, %s27
      %p38 = scmp.eq.s32.totalorder %s18, 0
      %p39 = por %p37, %p38
      %p40 = scmp.ne.s32.totalorder %s26, %s27
      %p41 = scmp.eq.s32.totalorder %s19, 1
      %p42 = por %p40, %p41
      %p44 = scmp.ne.s32.totalorder %s27, %s43
      %p45 = scmp.eq.s32.totalorder %s19, 0
      %p46 = por %p44, %p45
      %s48 = sadd.s32 %s47, 1
      %p51 = scmp.eq.s32.totalorder %s13, 1
      %p52 = scmp.ne.s32.totalorder %s47, %s49
      %p53 = scmp.eq.s32.totalorder %s13, 0
      %p54 = por %p52, %p53
      %p55 = scmp.ne.s32.totalorder %s47, %s49
      %p56 = scmp.eq.s32.totalorder %s18, 1
      %p57 = por %p55, %p56
      %p58 = scmp.ne.s32.totalorder %s49, %s50
      %p59 = scmp.eq.s32.totalorder %s18, 0
      %p60 = por %p58, %p59
      %p61 = scmp.ne.s32.totalorder %s49, %s50
      %p62 = scmp.eq.s32.totalorder %s19, 1
      %p63 = por %p61, %p62
      %p65 = scmp.ne.s32.totalorder %s50, %s64
      %p66 = scmp.eq.s32.totalorder %s19, 0
      %p67 = por %p65, %p66
      %s69 = sadd.s32 %s68, 1
      %p72 = scmp.eq.s32.totalorder %s13, 1
      %p73 = scmp.ne.s32.totalorder %s68, %s70
      %p74 = scmp.eq.s32.totalorder %s13, 0
      %p75 = por %p73, %p74
      %p76 = scmp.ne.s32.totalorder %s68, %s70
      %p77 = scmp.eq.s32.totalorder %s18, 1
      %p78 = por %p76, %p77
      %p79 = scmp.ne.s32.totalorder %s70, %s71
      %p80 = scmp.eq.s32.totalorder %s18, 0
      %p81 = por %p79, %p80
      %p82 = scmp.ne.s32.totalorder %s70, %s71
      %p83 = scmp.eq.s32.totalorder %s19, 1
      %p84 = por %p82, %p83
      %p86 = scmp.ne.s32.totalorder %s71, %s85
      %p87 = scmp.eq.s32.totalorder %s19, 0
      %p88 = por %p86, %p87
      %s90 = sadd.s32 %s89, 1
      %p93 = scmp.eq.s32.totalorder %s13, 1
      %p94 = scmp.ne.s32.totalorder %s89, %s91
      %p95 = scmp.eq.s32.totalorder %s13, 0
      %p96 = por %p94, %p95
      %p97 = scmp.ne.s32.totalorder %s89, %s91
      %p98 = scmp.eq.s32.totalorder %s18, 1
      %p99 = por %p97, %p98
      %p100 = scmp.ne.s32.totalorder %s91, %s92
      %p101 = scmp.eq.s32.totalorder %s18, 0
      %p102 = por %p100, %p101
      %p103 = scmp.ne.s32.totalorder %s91, %s92
      %p104 = scmp.eq.s32.totalorder %s19, 1
      %p105 = por %p103, %p104
      %p107 = scmp.ne.s32.totalorder %s92, %s106
      %p108 = scmp.eq.s32.totalorder %s19, 0
      %p109 = por %p107, %p108
      %s110 = ssub.s32 %s13, %s20
      %p111 = scmp.eq.s32.totalorder %s110, 0
      %s113 = sadd.s32 %s112, 1
      %s114 = scalar_select %p111, %s112, %s113
      %p117 = pneg %p111
      %p118 = scmp.eq.s32.totalorder %s13, 1
      %p119 = por %p117, %p118
      %p120 = scmp.ne.s32.totalorder %s112, %s115
      %p121 = scmp.eq.s32.totalorder %s13, 0
      %p122 = por %p120, %p121
      %p123 = scmp.ne.s32.totalorder %s112, %s115
      %p124 = scmp.eq.s32.totalorder %s18, 1
      %p125 = por %p123, %p124
      %p126 = scmp.ne.s32.totalorder %s115, %s116
      %p127 = scmp.eq.s32.totalorder %s18, 0
      %p128 = por %p126, %p127
      %p129 = scmp.ne.s32.totalorder %s115, %s116
      %p130 = scmp.eq.s32.totalorder %s19, 1
      %p131 = por %p129, %p130
      %p133 = scmp.ne.s32.totalorder %s116, %s132
      %p134 = scmp.eq.s32.totalorder %s19, 0
      %p135 = por %p133, %p134
      %p136 = scmp.le.s32.totalorder 1, %s13
      %p137 = scmp.lt.s32.totalorder %s13, 3
      %p138 = pnand %p136, %p137
      %p139 = pneg %p138
      // Predicated region
      $region9: #{tpu_custom_call.1} parent=5 // pred_check
        _
      $region10: #{tpu_custom_call.1} parent=5 // pred_check_branch
        %141 = sbr.rel (%p138) target = $region12
      $region11: #{tpu_custom_call.1} parent=5 // pred_region
        %s142 = ssub.s32 %s13, 1
        // Predicated region
        $region13: #{tpu_custom_call.1} parent=11 // pred_check
          %p143 = pneg %p60
        $region14: #{tpu_custom_call.1} parent=11 // pred_check_branch
          %145 = sbr.rel (%p143) target = $region16
        $region15: #{tpu_custom_call.1} parent=11 // pred_region
          _
        $region16: #{tpu_custom_call.1} parent=11 // pred_fallthru
          _
        // Predicated region
        $region17: #{tpu_custom_call.1} parent=11 // pred_check
          %p146 = pneg %p81
        $region18: #{tpu_custom_call.1} parent=11 // pred_check_branch
          %148 = sbr.rel (%p146) target = $region20
        $region19: #{tpu_custom_call.1} parent=11 // pred_region
          _
        $region20: #{tpu_custom_call.1} parent=11 // pred_fallthru
          _
        // Predicated region
        $region21: #{tpu_custom_call.1} parent=11 // pred_check
          %p149 = pneg %p102
        $region22: #{tpu_custom_call.1} parent=11 // pred_check_branch
          %151 = sbr.rel (%p149) target = $region24
        $region23: #{tpu_custom_call.1} parent=11 // pred_region
          _
        $region24: #{tpu_custom_call.1} parent=11 // pred_fallthru
          _
      $region12: #{tpu_custom_call.1} parent=5 // pred_fallthru
        _
      %p152 = scmp.lt.s32.totalorder %s13, 2
      // Predicated region
      $region25: #{tpu_custom_call.1} parent=5 // pred_check
        %p153 = pneg %p152
      $region26: #{tpu_custom_call.1} parent=5 // pred_check_branch
        %155 = sbr.rel (%p153) target = $region28
      $region27: #{tpu_custom_call.1} parent=5 // pred_region
        // Predicated region
        $region29: #{tpu_custom_call.1} parent=27 // pred_check
          %p156 = pneg %p33
        $region30: #{tpu_custom_call.1} parent=27 // pred_check_branch
          %158 = sbr.rel (%p156) target = $region32
        $region31: #{tpu_custom_call.1} parent=27 // pred_region
          %p159 = scmp.lt.s32.totalorder %s13, 1
          %s160 = scalar_select %p159, %s13, 1
          %s161 = smul.addr %s160, 32
          %s162 = smul.addr %s161, 8
          %s163 = scalar_lea.vmem %s0, %s162
        $region32: #{tpu_custom_call.1} parent=27 // pred_fallthru
          _
      $region28: #{tpu_custom_call.1} parent=5 // pred_fallthru
        _
      %p164 = scmp.le.s32.totalorder 1, %s13
      %p165 = scmp.lt.s32.totalorder %s13, 3
      %p166 = pnand %p164, %p165
      %p167 = pneg %p166
      // Predicated region
      $region33: #{tpu_custom_call.1} parent=5 // pred_check
        _
      $region34: #{tpu_custom_call.1} parent=5 // pred_check_branch
        %169 = sbr.rel (%p166) target = $region36
      $region35: #{tpu_custom_call.1} parent=5 // pred_region
        %s170 = ssub.s32 %s13, 1
        %p171 = scmp.lt.s32.totalorder %s18, 1
        %s172 = scalar_select %p171, %s18, 1
        %s173 = smul.addr %s172, 32
        %s174 = smul.addr %s173, 8
        %s175 = scalar_lea.vmem %s0, %s174
        %p176 = pneg %p39
        %p177 = pneg %p36
        %p178 = pneg %p60
        %p179 = pneg %p57
        %p180 = pneg %p81
        %p181 = pneg %p78
        %p182 = pneg %p102
        %p183 = pneg %p99
        %p184 = pneg %p128
        %p185 = pneg %p125
        %s186 = sand.u32 %s115, 1
        %s187 = scalar_lea.sflag [#allocation5], %s186
        %s188 = sand.u32 %s115, 1
        %s189 = smul.addr %s188, 256
        %s190 = scalar_lea.vmem [#allocation4], %s189
        %p191 = scmp.lt.s32.totalorder %s18, 1
        %s192 = scalar_select %p191, %s18, 1
        %s193 = smul.addr %s192, 32
        %s194 = smul.addr %s193, 8
        %s195 = scalar_lea.vmem %s0, %s194
        %v197 = vld [vmem:[%s195] sm:$0xff]
        %v198 = vld [vmem:[%s195 + $0x8] sm:$0xff]
        %v199 = vld [vmem:[%s195 + $0x10] sm:$0xff]
        %v200 = vld [vmem:[%s195 + $0x18] sm:$0xff]
        %v201 = vld [vmem:[%s195 + $0x20] sm:$0xff]
        %v202 = vld [vmem:[%s195 + $0x28] sm:$0xff]
        %v203 = vld [vmem:[%s195 + $0x30] sm:$0xff]
        %v204 = vld [vmem:[%s195 + $0x38] sm:$0xff]
        %v205 = vld [vmem:[%s195 + $0x40] sm:$0xff]
        %v206 = vld [vmem:[%s195 + $0x48] sm:$0xff]
        %v207 = vld [vmem:[%s195 + $0x50] sm:$0xff]
        %v208 = vld [vmem:[%s195 + $0x58] sm:$0xff]
        %v209 = vld [vmem:[%s195 + $0x60] sm:$0xff]
        %v210 = vld [vmem:[%s195 + $0x68] sm:$0xff]
        %v211 = vld [vmem:[%s195 + $0x70] sm:$0xff]
        %v212 = vld [vmem:[%s195 + $0x78] sm:$0xff]
        %v213 = vld [vmem:[%s195 + $0x80] sm:$0xff]
        %v214 = vld [vmem:[%s195 + $0x88] sm:$0xff]
        %v215 = vld [vmem:[%s195 + $0x90] sm:$0xff]
        %v216 = vld [vmem:[%s195 + $0x98] sm:$0xff]
        %v217 = vld [vmem:[%s195 + $0xa0] sm:$0xff]
        %v218 = vld [vmem:[%s195 + $0xa8] sm:$0xff]
        %v219 = vld [vmem:[%s195 + $0xb0] sm:$0xff]
        %v220 = vld [vmem:[%s195 + $0xb8] sm:$0xff]
        %v221 = vld [vmem:[%s195 + $0xc0] sm:$0xff]
        %v222 = vld [vmem:[%s195 + $0xc8] sm:$0xff]
        %v223 = vld [vmem:[%s195 + $0xd0] sm:$0xff]
        %v224 = vld [vmem:[%s195 + $0xd8] sm:$0xff]
        %v225 = vld [vmem:[%s195 + $0xe0] sm:$0xff]
        %v226 = vld [vmem:[%s195 + $0xe8] sm:$0xff]
        %v227 = vld [vmem:[%s195 + $0xf0] sm:$0xff]
        %v228 = vld [vmem:[%s195 + $0xf8] sm:$0xff]
        %s229 = scalar_lea.vmem [#allocation2], 24
        %vm230 = vcmask 31744
        %231 = vst.msk [vmem:[%s229 + $0x1] sm:$0xff] %vm230, %v197
        %232 = vst.msk [vmem:[%s229 + $0x9] sm:$0xff] %vm230, %v198
        %233 = vst.msk [vmem:[%s229 + $0x19] sm:$0xff] %vm230, %v199
        %234 = vst.msk [vmem:[%s229 + $0x21] sm:$0xff] %vm230, %v200
        %235 = vst.msk [vmem:[%s229 + $0x31] sm:$0xff] %vm230, %v201
        %236 = vst.msk [vmem:[%s229 + $0x39] sm:$0xff] %vm230, %v202
        %237 = vst.msk [vmem:[%s229 + $0x49] sm:$0xff] %vm230, %v203
        %238 = vst.msk [vmem:[%s229 + $0x51] sm:$0xff] %vm230, %v204
        %239 = vst.msk [vmem:[%s229 + $0x61] sm:$0xff] %vm230, %v205
        %240 = vst.msk [vmem:[%s229 + $0x69] sm:$0xff] %vm230, %v206
        %241 = vst.msk [vmem:[%s229 + $0x79] sm:$0xff] %vm230, %v207
        %242 = vst.msk [vmem:[%s229 + $0x81] sm:$0xff] %vm230, %v208
        %243 = vst.msk [vmem:[%s229 + $0x91] sm:$0xff] %vm230, %v209
        %244 = vst.msk [vmem:[%s229 + $0x99] sm:$0xff] %vm230, %v210
        %245 = vst.msk [vmem:[%s229 + $0xa9] sm:$0xff] %vm230, %v211
        %246 = vst.msk [vmem:[%s229 + $0xb1] sm:$0xff] %vm230, %v212
        %247 = vst.msk [vmem:[%s229 + $0xc1] sm:$0xff] %vm230, %v213
        %248 = vst.msk [vmem:[%s229 + $0xc9] sm:$0xff] %vm230, %v214
        %249 = vst.msk [vmem:[%s229 + $0xd9] sm:$0xff] %vm230, %v215
        %250 = vst.msk [vmem:[%s229 + $0xe1] sm:$0xff] %vm230, %v216
        %251 = vst.msk [vmem:[%s229 + $0xf1] sm:$0xff] %vm230, %v217
        %252 = vst.msk [vmem:[%s229 + $0xf9] sm:$0xff] %vm230, %v218
        %253 = vst.msk [vmem:[%s229 + $0x109] sm:$0xff] %vm230, %v219
        %254 = vst.msk [vmem:[%s229 + $0x111] sm:$0xff] %vm230, %v220
        %255 = vst.msk [vmem:[%s229 + $0x121] sm:$0xff] %vm230, %v221
        %256 = vst.msk [vmem:[%s229 + $0x129] sm:$0xff] %vm230, %v222
        %257 = vst.msk [vmem:[%s229 + $0x139] sm:$0xff] %vm230, %v223
        %258 = vst.msk [vmem:[%s229 + $0x141] sm:$0xff] %vm230, %v224
        %259 = vst.msk [vmem:[%s229 + $0x151] sm:$0xff] %vm230, %v225
        %260 = vst.msk [vmem:[%s229 + $0x159] sm:$0xff] %vm230, %v226
        %261 = vst.msk [vmem:[%s229 + $0x169] sm:$0xff] %vm230, %v227
        %262 = vst.msk [vmem:[%s229 + $0x171] sm:$0xff] %vm230, %v228
        %263 = vst.msk [vmem:[#allocation2] sm:$0xff] %vm230, 0.0
        %264 = vst.msk [vmem:[#allocation2 + $0x8] sm:$0xff] %vm230, 0.0
        %vm265 = vcmask 25600
        %266 = vst.msk [vmem:[#allocation2 + $0x10] sm:$0x3] %vm265, 0.0
        %s267 = scalar_lea.vmem [#allocation2], 408
        %268 = vst.msk [vmem:[%s267] sm:$0xff] %vm230, 0.0
        %269 = vst.msk [vmem:[%s267 + $0x8] sm:$0xff] %vm230, 0.0
        %270 = vst.msk [vmem:[%s267 + $0x10] sm:$0x3] %vm265, 0.0
        %vm271 = vcmask 24576
        %272 = vst.msk [vmem:[%s229] sm:$0x1] %vm271, 0.0
        %273 = vst.msk [vmem:[%s229 + $0x18] sm:$0x1] %vm271, 0.0
        %274 = vst.msk [vmem:[%s229 + $0x30] sm:$0x1] %vm271, 0.0
        %275 = vst.msk [vmem:[%s229 + $0x48] sm:$0x1] %vm271, 0.0
        %276 = vst.msk [vmem:[%s229 + $0x60] sm:$0x1] %vm271, 0.0
        %277 = vst.msk [vmem:[%s229 + $0x78] sm:$0x1] %vm271, 0.0
        %278 = vst.msk [vmem:[%s229 + $0x90] sm:$0x1] %vm271, 0.0
        %279 = vst.msk [vmem:[%s229 + $0xa8] sm:$0x1] %vm271, 0.0
        %280 = vst.msk [vmem:[%s229 + $0xc0] sm:$0x1] %vm271, 0.0
        %281 = vst.msk [vmem:[%s229 + $0xd8] sm:$0x1] %vm271, 0.0
        %282 = vst.msk [vmem:[%s229 + $0xf0] sm:$0x1] %vm271, 0.0
        %283 = vst.msk [vmem:[%s229 + $0x108] sm:$0x1] %vm271, 0.0
        %284 = vst.msk [vmem:[%s229 + $0x120] sm:$0x1] %vm271, 0.0
        %285 = vst.msk [vmem:[%s229 + $0x138] sm:$0x1] %vm271, 0.0
        %286 = vst.msk [vmem:[%s229 + $0x150] sm:$0x1] %vm271, 0.0
        %287 = vst.msk [vmem:[%s229 + $0x168] sm:$0x1] %vm271, 0.0
        %288 = vst.msk [vmem:[%s229 + $0x11] sm:$0x1] %vm271, 0.0
        %289 = vst.msk [vmem:[%s229 + $0x29] sm:$0x1] %vm271, 0.0
        %290 = vst.msk [vmem:[%s229 + $0x41] sm:$0x1] %vm271, 0.0
        %291 = vst.msk [vmem:[%s229 + $0x59] sm:$0x1] %vm271, 0.0
        %292 = vst.msk [vmem:[%s229 + $0x71] sm:$0x1] %vm271, 0.0
        %293 = vst.msk [vmem:[%s229 + $0x89] sm:$0x1] %vm271, 0.0
        %294 = vst.msk [vmem:[%s229 + $0xa1] sm:$0x1] %vm271, 0.0
        %295 = vst.msk [vmem:[%s229 + $0xb9] sm:$0x1] %vm271, 0.0
        %296 = vst.msk [vmem:[%s229 + $0xd1] sm:$0x1] %vm271, 0.0
        %297 = vst.msk [vmem:[%s229 + $0xe9] sm:$0x1] %vm271, 0.0
        %298 = vst.msk [vmem:[%s229 + $0x101] sm:$0x1] %vm271, 0.0
        %299 = vst.msk [vmem:[%s229 + $0x119] sm:$0x1] %vm271, 0.0
        %300 = vst.msk [vmem:[%s229 + $0x131] sm:$0x1] %vm271, 0.0
        %301 = vst.msk [vmem:[%s229 + $0x149] sm:$0x1] %vm271, 0.0
        %302 = vst.msk [vmem:[%s229 + $0x161] sm:$0x1] %vm271, 0.0
        %303 = vst.msk [vmem:[%s229 + $0x179] sm:$0x1] %vm271, 0.0
        %v304 = vld [vmem:[#allocation2] sm:$0xff]
        %v305 = vld [vmem:[#allocation2 + $0x8] sm:$0xff]
        %v306 = vld [vmem:[#allocation2 + $0x18] sm:$0xff]
        %v307 = vld [vmem:[#allocation2 + $0x20] sm:$0xff]
        %v308 = vld [vmem:[#allocation2 + $0x30] sm:$0xff]
        %v309 = vld [vmem:[#allocation2 + $0x38] sm:$0xff]
        %v310 = vld [vmem:[#allocation2 + $0x48] sm:$0xff]
        %v311 = vld [vmem:[#allocation2 + $0x50] sm:$0xff]
        %v312 = vld [vmem:[#allocation2 + $0x60] sm:$0xff]
        %v313 = vld [vmem:[#allocation2 + $0x68] sm:$0xff]
        %v314 = vld [vmem:[#allocation2 + $0x78] sm:$0xff]
        %v315 = vld [vmem:[#allocation2 + $0x80] sm:$0xff]
        %v316 = vld [vmem:[#allocation2 + $0x90] sm:$0xff]
        %v317 = vld [vmem:[#allocation2 + $0x98] sm:$0xff]
        %v318 = vld [vmem:[#allocation2 + $0xa8] sm:$0xff]
        %v319 = vld [vmem:[#allocation2 + $0xb0] sm:$0xff]
        %v320 = vld [vmem:[#allocation2 + $0xc0] sm:$0xff]
        %v321 = vld [vmem:[#allocation2 + $0xc8] sm:$0xff]
        %v322 = vld [vmem:[#allocation2 + $0xd8] sm:$0xff]
        %v323 = vld [vmem:[#allocation2 + $0xe0] sm:$0xff]
        %v324 = vld [vmem:[#allocation2 + $0xf0] sm:$0xff]
        %v325 = vld [vmem:[#allocation2 + $0xf8] sm:$0xff]
        %v326 = vld [vmem:[#allocation2 + $0x108] sm:$0xff]
        %v327 = vld [vmem:[#allocation2 + $0x110] sm:$0xff]
        %v328 = vld [vmem:[#allocation2 + $0x120] sm:$0xff]
        %v329 = vld [vmem:[#allocation2 + $0x128] sm:$0xff]
        %v330 = vld [vmem:[#allocation2 + $0x138] sm:$0xff]
        %v331 = vld [vmem:[#allocation2 + $0x140] sm:$0xff]
        %v332 = vld [vmem:[#allocation2 + $0x150] sm:$0xff]
        %v333 = vld [vmem:[#allocation2 + $0x158] sm:$0xff]
        %v334 = vld [vmem:[#allocation2 + $0x168] sm:$0xff]
        %v335 = vld [vmem:[#allocation2 + $0x170] sm:$0xff]
        %336 = vst.msk [vmem:[#allocation3] sm:$0xff] %vm230, %v304
        %337 = vst.msk [vmem:[#allocation3 + $0x8] sm:$0xff] %vm230, %v305
        %338 = vst.msk [vmem:[#allocation3 + $0x10] sm:$0xff] %vm230, %v306
        %339 = vst.msk [vmem:[#allocation3 + $0x18] sm:$0xff] %vm230, %v307
        %340 = vst.msk [vmem:[#allocation3 + $0x20] sm:$0xff] %vm230, %v308
        %341 = vst.msk [vmem:[#allocation3 + $0x28] sm:$0xff] %vm230, %v309
        %342 = vst.msk [vmem:[#allocation3 + $0x30] sm:$0xff] %vm230, %v310
        %343 = vst.msk [vmem:[#allocation3 + $0x38] sm:$0xff] %vm230, %v311
        %344 = vst.msk [vmem:[#allocation3 + $0x40] sm:$0xff] %vm230, %v312
        %345 = vst.msk [vmem:[#allocation3 + $0x48] sm:$0xff] %vm230, %v313
        %346 = vst.msk [vmem:[#allocation3 + $0x50] sm:$0xff] %vm230, %v314
        %347 = vst.msk [vmem:[#allocation3 + $0x58] sm:$0xff] %vm230, %v315
        %348 = vst.msk [vmem:[#allocation3 + $0x60] sm:$0xff] %vm230, %v316
        %349 = vst.msk [vmem:[#allocation3 + $0x68] sm:$0xff] %vm230, %v317
        %350 = vst.msk [vmem:[#allocation3 + $0x70] sm:$0xff] %vm230, %v318
        %351 = vst.msk [vmem:[#allocation3 + $0x78] sm:$0xff] %vm230, %v319
        %352 = vst.msk [vmem:[#allocation3 + $0x80] sm:$0xff] %vm230, %v320
        %353 = vst.msk [vmem:[#allocation3 + $0x88] sm:$0xff] %vm230, %v321
        %354 = vst.msk [vmem:[#allocation3 + $0x90] sm:$0xff] %vm230, %v322
        %355 = vst.msk [vmem:[#allocation3 + $0x98] sm:$0xff] %vm230, %v323
        %356 = vst.msk [vmem:[#allocation3 + $0xa0] sm:$0xff] %vm230, %v324
        %357 = vst.msk [vmem:[#allocation3 + $0xa8] sm:$0xff] %vm230, %v325
        %358 = vst.msk [vmem:[#allocation3 + $0xb0] sm:$0xff] %vm230, %v326
        %359 = vst.msk [vmem:[#allocation3 + $0xb8] sm:$0xff] %vm230, %v327
        %360 = vst.msk [vmem:[#allocation3 + $0xc0] sm:$0xff] %vm230, %v328
        %361 = vst.msk [vmem:[#allocation3 + $0xc8] sm:$0xff] %vm230, %v329
        %362 = vst.msk [vmem:[#allocation3 + $0xd0] sm:$0xff] %vm230, %v330
        %363 = vst.msk [vmem:[#allocation3 + $0xd8] sm:$0xff] %vm230, %v331
        %364 = vst.msk [vmem:[#allocation3 + $0xe0] sm:$0xff] %vm230, %v332
        %365 = vst.msk [vmem:[#allocation3 + $0xe8] sm:$0xff] %vm230, %v333
        %366 = vst.msk [vmem:[#allocation3 + $0xf0] sm:$0xff] %vm230, %v334
        %367 = vst.msk [vmem:[#allocation3 + $0xf8] sm:$0xff] %vm230, %v335
        %v368 = vld [vmem:[#allocation2 + $0x1] sm:$0xff]
        %v369 = vld [vmem:[#allocation2 + $0x9] sm:$0xff]
        %v370 = vld [vmem:[#allocation2 + $0x19] sm:$0xff]
        %v371 = vld [vmem:[#allocation2 + $0x21] sm:$0xff]
        %v372 = vld [vmem:[#allocation2 + $0x31] sm:$0xff]
        %v373 = vld [vmem:[#allocation2 + $0x39] sm:$0xff]
        %v374 = vld [vmem:[#allocation2 + $0x49] sm:$0xff]
        %v375 = vld [vmem:[#allocation2 + $0x51] sm:$0xff]
        %v376 = vld [vmem:[#allocation2 + $0x61] sm:$0xff]
        %v377 = vld [vmem:[#allocation2 + $0x69] sm:$0xff]
        %v378 = vld [vmem:[#allocation2 + $0x79] sm:$0xff]
        %v379 = vld [vmem:[#allocation2 + $0x81] sm:$0xff]
        %v380 = vld [vmem:[#allocation2 + $0x91] sm:$0xff]
        %v381 = vld [vmem:[#allocation2 + $0x99] sm:$0xff]
        %v382 = vld [vmem:[#allocation2 + $0xa9] sm:$0xff]
        %v383 = vld [vmem:[#allocation2 + $0xb1] sm:$0xff]
        %v384 = vld [vmem:[#allocation2 + $0xc1] sm:$0xff]
        %v385 = vld [vmem:[#allocation2 + $0xc9] sm:$0xff]
        %v386 = vld [vmem:[#allocation2 + $0xd9] sm:$0xff]
        %v387 = vld [vmem:[#allocation2 + $0xe1] sm:$0xff]
        %v388 = vld [vmem:[#allocation2 + $0xf1] sm:$0xff]
        %v389 = vld [vmem:[#allocation2 + $0xf9] sm:$0xff]
        %v390 = vld [vmem:[#allocation2 + $0x109] sm:$0xff]
        %v391 = vld [vmem:[#allocation2 + $0x111] sm:$0xff]
        %v392 = vld [vmem:[#allocation2 + $0x121] sm:$0xff]
        %v393 = vld [vmem:[#allocation2 + $0x129] sm:$0xff]
        %v394 = vld [vmem:[#allocation2 + $0x139] sm:$0xff]
        %v395 = vld [vmem:[#allocation2 + $0x141] sm:$0xff]
        %v396 = vld [vmem:[#allocation2 + $0x151] sm:$0xff]
        %v397 = vld [vmem:[#allocation2 + $0x159] sm:$0xff]
        %v398 = vld [vmem:[#allocation2 + $0x169] sm:$0xff]
        %v399 = vld [vmem:[#allocation2 + $0x171] sm:$0xff]
        %432 = vrot.lane.b32.xlu0 %v368, 4
        %v433 = vpop.permute.xlu0 %432
        %434 = vrot.lane.b32.xlu0 %v369, 4
        %v435 = vpop.permute.xlu0 %434
        %436 = vrot.lane.b32.xlu0 %v370, 4
        %v437 = vpop.permute.xlu0 %436
        %438 = vrot.lane.b32.xlu0 %v371, 4
        %v439 = vpop.permute.xlu0 %438
        %440 = vrot.lane.b32.xlu0 %v372, 4
        %v441 = vpop.permute.xlu0 %440
        %442 = vrot.lane.b32.xlu0 %v373, 4
        %v443 = vpop.permute.xlu0 %442
        %444 = vrot.lane.b32.xlu0 %v374, 4
        %v445 = vpop.permute.xlu0 %444
        %446 = vrot.lane.b32.xlu0 %v375, 4
        %v447 = vpop.permute.xlu0 %446
        %448 = vrot.lane.b32.xlu0 %v376, 4
        %v449 = vpop.permute.xlu0 %448
        %450 = vrot.lane.b32.xlu0 %v377, 4
        %v451 = vpop.permute.xlu0 %450
        %452 = vrot.lane.b32.xlu0 %v378, 4
        %v453 = vpop.permute.xlu0 %452
        %454 = vrot.lane.b32.xlu0 %v379, 4
        %v455 = vpop.permute.xlu0 %454
        %456 = vrot.lane.b32.xlu0 %v380, 4
        %v457 = vpop.permute.xlu0 %456
        %458 = vrot.lane.b32.xlu0 %v381, 4
        %v459 = vpop.permute.xlu0 %458
        %460 = vrot.lane.b32.xlu0 %v382, 4
        %v461 = vpop.permute.xlu0 %460
        %462 = vrot.lane.b32.xlu0 %v383, 4
        %v463 = vpop.permute.xlu0 %462
        %464 = vrot.lane.b32.xlu0 %v384, 4
        %v465 = vpop.permute.xlu0 %464
        %466 = vrot.lane.b32.xlu0 %v385, 4
        %v467 = vpop.permute.xlu0 %466
        %468 = vrot.lane.b32.xlu0 %v386, 4
        %v469 = vpop.permute.xlu0 %468
        %470 = vrot.lane.b32.xlu0 %v387, 4
        %v471 = vpop.permute.xlu0 %470
        %472 = vrot.lane.b32.xlu0 %v388, 4
        %v473 = vpop.permute.xlu0 %472
        %474 = vrot.lane.b32.xlu0 %v389, 4
        %v475 = vpop.permute.xlu0 %474
        %476 = vrot.lane.b32.xlu0 %v390, 4
        %v477 = vpop.permute.xlu0 %476
        %478 = vrot.lane.b32.xlu0 %v391, 4
        %v479 = vpop.permute.xlu0 %478
        %480 = vrot.lane.b32.xlu0 %v392, 4
        %v481 = vpop.permute.xlu0 %480
        %482 = vrot.lane.b32.xlu0 %v393, 4
        %v483 = vpop.permute.xlu0 %482
        %484 = vrot.lane.b32.xlu0 %v394, 4
        %v485 = vpop.permute.xlu0 %484
        %486 = vrot.lane.b32.xlu0 %v395, 4
        %v487 = vpop.permute.xlu0 %486
        %488 = vrot.lane.b32.xlu0 %v396, 4
        %v489 = vpop.permute.xlu0 %488
        %490 = vrot.lane.b32.xlu0 %v397, 4
        %v491 = vpop.permute.xlu0 %490
        %492 = vrot.lane.b32.xlu0 %v398, 4
        %v493 = vpop.permute.xlu0 %492
        %494 = vrot.lane.b32.xlu0 %v399, 4
        %v495 = vpop.permute.xlu0 %494
        %vm528 = vcmask 64544
        %529 = vst.msk [vmem:[#allocation3] sm:$0xff] %vm528, %v433
        %530 = vst.msk [vmem:[#allocation3 + $0x8] sm:$0xff] %vm528, %v435
        %531 = vst.msk [vmem:[#allocation3 + $0x10] sm:$0xff] %vm528, %v437
        %532 = vst.msk [vmem:[#allocation3 + $0x18] sm:$0xff] %vm528, %v439
        %533 = vst.msk [vmem:[#allocation3 + $0x20] sm:$0xff] %vm528, %v441
        %534 = vst.msk [vmem:[#allocation3 + $0x28] sm:$0xff] %vm528, %v443
        %535 = vst.msk [vmem:[#allocation3 + $0x30] sm:$0xff] %vm528, %v445
        %536 = vst.msk [vmem:[#allocation3 + $0x38] sm:$0xff] %vm528, %v447
        %537 = vst.msk [vmem:[#allocation3 + $0x40] sm:$0xff] %vm528, %v449
        %538 = vst.msk [vmem:[#allocation3 + $0x48] sm:$0xff] %vm528, %v451
        %539 = vst.msk [vmem:[#allocation3 + $0x50] sm:$0xff] %vm528, %v453
        %540 = vst.msk [vmem:[#allocation3 + $0x58] sm:$0xff] %vm528, %v455
        %541 = vst.msk [vmem:[#allocation3 + $0x60] sm:$0xff] %vm528, %v457
        %542 = vst.msk [vmem:[#allocation3 + $0x68] sm:$0xff] %vm528, %v459
        %543 = vst.msk [vmem:[#allocation3 + $0x70] sm:$0xff] %vm528, %v461
        %544 = vst.msk [vmem:[#allocation3 + $0x78] sm:$0xff] %vm528, %v463
        %545 = vst.msk [vmem:[#allocation3 + $0x80] sm:$0xff] %vm528, %v465
        %546 = vst.msk [vmem:[#allocation3 + $0x88] sm:$0xff] %vm528, %v467
        %547 = vst.msk [vmem:[#allocation3 + $0x90] sm:$0xff] %vm528, %v469
        %548 = vst.msk [vmem:[#allocation3 + $0x98] sm:$0xff] %vm528, %v471
        %549 = vst.msk [vmem:[#allocation3 + $0xa0] sm:$0xff] %vm528, %v473
        %550 = vst.msk [vmem:[#allocation3 + $0xa8] sm:$0xff] %vm528, %v475
        %551 = vst.msk [vmem:[#allocation3 + $0xb0] sm:$0xff] %vm528, %v477
        %552 = vst.msk [vmem:[#allocation3 + $0xb8] sm:$0xff] %vm528, %v479
        %553 = vst.msk [vmem:[#allocation3 + $0xc0] sm:$0xff] %vm528, %v481
        %554 = vst.msk [vmem:[#allocation3 + $0xc8] sm:$0xff] %vm528, %v483
        %555 = vst.msk [vmem:[#allocation3 + $0xd0] sm:$0xff] %vm528, %v485
        %556 = vst.msk [vmem:[#allocation3 + $0xd8] sm:$0xff] %vm528, %v487
        %557 = vst.msk [vmem:[#allocation3 + $0xe0] sm:$0xff] %vm528, %v489
        %558 = vst.msk [vmem:[#allocation3 + $0xe8] sm:$0xff] %vm528, %v491
        %559 = vst.msk [vmem:[#allocation3 + $0xf0] sm:$0xff] %vm528, %v493
        %560 = vst.msk [vmem:[#allocation3 + $0xf8] sm:$0xff] %vm528, %v495
        %v561 = vld [vmem:[#allocation2 + $0x2] sm:$0xff]
        %v562 = vld [vmem:[#allocation2 + $0xa] sm:$0xff]
        %v563 = vld [vmem:[#allocation2 + $0x1a] sm:$0xff]
        %v564 = vld [vmem:[#allocation2 + $0x22] sm:$0xff]
        %v565 = vld [vmem:[#allocation2 + $0x32] sm:$0xff]
        %v566 = vld [vmem:[#allocation2 + $0x3a] sm:$0xff]
        %v567 = vld [vmem:[#allocation2 + $0x4a] sm:$0xff]
        %v568 = vld [vmem:[#allocation2 + $0x52] sm:$0xff]
        %v569 = vld [vmem:[#allocation2 + $0x62] sm:$0xff]
        %v570 = vld [vmem:[#allocation2 + $0x6a] sm:$0xff]
        %v571 = vld [vmem:[#allocation2 + $0x7a] sm:$0xff]
        %v572 = vld [vmem:[#allocation2 + $0x82] sm:$0xff]
        %v573 = vld [vmem:[#allocation2 + $0x92] sm:$0xff]
        %v574 = vld [vmem:[#allocation2 + $0x9a] sm:$0xff]
        %v575 = vld [vmem:[#allocation2 + $0xaa] sm:$0xff]
        %v576 = vld [vmem:[#allocation2 + $0xb2] sm:$0xff]
        %v577 = vld [vmem:[#allocation2 + $0xc2] sm:$0xff]
        %v578 = vld [vmem:[#allocation2 + $0xca] sm:$0xff]
        %v579 = vld [vmem:[#allocation2 + $0xda] sm:$0xff]
        %v580 = vld [vmem:[#allocation2 + $0xe2] sm:$0xff]
        %v581 = vld [vmem:[#allocation2 + $0xf2] sm:$0xff]
        %v582 = vld [vmem:[#allocation2 + $0xfa] sm:$0xff]
        %v583 = vld [vmem:[#allocation2 + $0x10a] sm:$0xff]
        %v584 = vld [vmem:[#allocation2 + $0x112] sm:$0xff]
        %v585 = vld [vmem:[#allocation2 + $0x122] sm:$0xff]
        %v586 = vld [vmem:[#allocation2 + $0x12a] sm:$0xff]
        %v587 = vld [vmem:[#allocation2 + $0x13a] sm:$0xff]
        %v588 = vld [vmem:[#allocation2 + $0x142] sm:$0xff]
        %v589 = vld [vmem:[#allocation2 + $0x152] sm:$0xff]
        %v590 = vld [vmem:[#allocation2 + $0x15a] sm:$0xff]
        %v591 = vld [vmem:[#allocation2 + $0x16a] sm:$0xff]
        %v592 = vld [vmem:[#allocation2 + $0x172] sm:$0xff]
        %625 = vrot.lane.b32.xlu0 %v561, 8
        %v626 = vpop.permute.xlu0 %625
        %627 = vrot.lane.b32.xlu0 %v562, 8
        %v628 = vpop.permute.xlu0 %627
        %629 = vrot.lane.b32.xlu0 %v563, 8
        %v630 = vpop.permute.xlu0 %629
        %631 = vrot.lane.b32.xlu0 %v564, 8
        %v632 = vpop.permute.xlu0 %631
        %633 = vrot.lane.b32.xlu0 %v565, 8
        %v634 = vpop.permute.xlu0 %633
        %635 = vrot.lane.b32.xlu0 %v566, 8
        %v636 = vpop.permute.xlu0 %635
        %637 = vrot.lane.b32.xlu0 %v567, 8
        %v638 = vpop.permute.xlu0 %637
        %639 = vrot.lane.b32.xlu0 %v568, 8
        %v640 = vpop.permute.xlu0 %639
        %641 = vrot.lane.b32.xlu0 %v569, 8
        %v642 = vpop.permute.xlu0 %641
        %643 = vrot.lane.b32.xlu0 %v570, 8
        %v644 = vpop.permute.xlu0 %643
        %645 = vrot.lane.b32.xlu0 %v571, 8
        %v646 = vpop.permute.xlu0 %645
        %647 = vrot.lane.b32.xlu0 %v572, 8
        %v648 = vpop.permute.xlu0 %647
        %649 = vrot.lane.b32.xlu0 %v573, 8
        %v650 = vpop.permute.xlu0 %649
        %651 = vrot.lane.b32.xlu0 %v574, 8
        %v652 = vpop.permute.xlu0 %651
        %653 = vrot.lane.b32.xlu0 %v575, 8
        %v654 = vpop.permute.xlu0 %653
        %655 = vrot.lane.b32.xlu0 %v576, 8
        %v656 = vpop.permute.xlu0 %655
        %657 = vrot.lane.b32.xlu0 %v577, 8
        %v658 = vpop.permute.xlu0 %657
        %659 = vrot.lane.b32.xlu0 %v578, 8
        %v660 = vpop.permute.xlu0 %659
        %661 = vrot.lane.b32.xlu0 %v579, 8
        %v662 = vpop.permute.xlu0 %661
        %663 = vrot.lane.b32.xlu0 %v580, 8
        %v664 = vpop.permute.xlu0 %663
        %665 = vrot.lane.b32.xlu0 %v581, 8
        %v666 = vpop.permute.xlu0 %665
        %667 = vrot.lane.b32.xlu0 %v582, 8
        %v668 = vpop.permute.xlu0 %667
        %669 = vrot.lane.b32.xlu0 %v583, 8
        %v670 = vpop.permute.xlu0 %669
        %671 = vrot.lane.b32.xlu0 %v584, 8
        %v672 = vpop.permute.xlu0 %671
        %673 = vrot.lane.b32.xlu0 %v585, 8
        %v674 = vpop.permute.xlu0 %673
        %675 = vrot.lane.b32.xlu0 %v586, 8
        %v676 = vpop.permute.xlu0 %675
        %677 = vrot.lane.b32.xlu0 %v587, 8
        %v678 = vpop.permute.xlu0 %677
        %679 = vrot.lane.b32.xlu0 %v588, 8
        %v680 = vpop.permute.xlu0 %679
        %681 = vrot.lane.b32.xlu0 %v589, 8
        %v682 = vpop.permute.xlu0 %681
        %683 = vrot.lane.b32.xlu0 %v590, 8
        %v684 = vpop.permute.xlu0 %683
        %685 = vrot.lane.b32.xlu0 %v591, 8
        %v686 = vpop.permute.xlu0 %685
        %687 = vrot.lane.b32.xlu0 %v592, 8
        %v688 = vpop.permute.xlu0 %687
        %vm721 = vcmask 97344
        %722 = vst.msk [vmem:[#allocation3] sm:$0xff] %vm721, %v626
        %723 = vst.msk [vmem:[#allocation3 + $0x8] sm:$0xff] %vm721, %v628
        %724 = vst.msk [vmem:[#allocation3 + $0x10] sm:$0xff] %vm721, %v630
        %725 = vst.msk [vmem:[#allocation3 + $0x18] sm:$0xff] %vm721, %v632
        %726 = vst.msk [vmem:[#allocation3 + $0x20] sm:$0xff] %vm721, %v634
        %727 = vst.msk [vmem:[#allocation3 + $0x28] sm:$0xff] %vm721, %v636
        %728 = vst.msk [vmem:[#allocation3 + $0x30] sm:$0xff] %vm721, %v638
        %729 = vst.msk [vmem:[#allocation3 + $0x38] sm:$0xff] %vm721, %v640
        %730 = vst.msk [vmem:[#allocation3 + $0x40] sm:$0xff] %vm721, %v642
        %731 = vst.msk [vmem:[#allocation3 + $0x48] sm:$0xff] %vm721, %v644
        %732 = vst.msk [vmem:[#allocation3 + $0x50] sm:$0xff] %vm721, %v646
        %733 = vst.msk [vmem:[#allocation3 + $0x58] sm:$0xff] %vm721, %v648
        %734 = vst.msk [vmem:[#allocation3 + $0x60] sm:$0xff] %vm721, %v650
        %735 = vst.msk [vmem:[#allocation3 + $0x68] sm:$0xff] %vm721, %v652
        %736 = vst.msk [vmem:[#allocation3 + $0x70] sm:$0xff] %vm721, %v654
        %737 = vst.msk [vmem:[#allocation3 + $0x78] sm:$0xff] %vm721, %v656
        %738 = vst.msk [vmem:[#allocation3 + $0x80] sm:$0xff] %vm721, %v658
        %739 = vst.msk [vmem:[#allocation3 + $0x88] sm:$0xff] %vm721, %v660
        %740 = vst.msk [vmem:[#allocation3 + $0x90] sm:$0xff] %vm721, %v662
        %741 = vst.msk [vmem:[#allocation3 + $0x98] sm:$0xff] %vm721, %v664
        %742 = vst.msk [vmem:[#allocation3 + $0xa0] sm:$0xff] %vm721, %v666
        %743 = vst.msk [vmem:[#allocation3 + $0xa8] sm:$0xff] %vm721, %v668
        %744 = vst.msk [vmem:[#allocation3 + $0xb0] sm:$0xff] %vm721, %v670
        %745 = vst.msk [vmem:[#allocation3 + $0xb8] sm:$0xff] %vm721, %v672
        %746 = vst.msk [vmem:[#allocation3 + $0xc0] sm:$0xff] %vm721, %v674
        %747 = vst.msk [vmem:[#allocation3 + $0xc8] sm:$0xff] %vm721, %v676
        %748 = vst.msk [vmem:[#allocation3 + $0xd0] sm:$0xff] %vm721, %v678
        %749 = vst.msk [vmem:[#allocation3 + $0xd8] sm:$0xff] %vm721, %v680
        %750 = vst.msk [vmem:[#allocation3 + $0xe0] sm:$0xff] %vm721, %v682
        %751 = vst.msk [vmem:[#allocation3 + $0xe8] sm:$0xff] %vm721, %v684
        %752 = vst.msk [vmem:[#allocation3 + $0xf0] sm:$0xff] %vm721, %v686
        %753 = vst.msk [vmem:[#allocation3 + $0xf8] sm:$0xff] %vm721, %v688
        %v754 = vld [vmem:[%s229] sm:$0xff]
        %v755 = vld [vmem:[%s229 + $0x8] sm:$0xff]
        %v756 = vld [vmem:[%s229 + $0x18] sm:$0xff]
        %v757 = vld [vmem:[%s229 + $0x20] sm:$0xff]
        %v758 = vld [vmem:[%s229 + $0x30] sm:$0xff]
        %v759 = vld [vmem:[%s229 + $0x38] sm:$0xff]
        %v760 = vld [vmem:[%s229 + $0x48] sm:$0xff]
        %v761 = vld [vmem:[%s229 + $0x50] sm:$0xff]
        %v762 = vld [vmem:[%s229 + $0x60] sm:$0xff]
        %v763 = vld [vmem:[%s229 + $0x68] sm:$0xff]
        %v764 = vld [vmem:[%s229 + $0x78] sm:$0xff]
        %v765 = vld [vmem:[%s229 + $0x80] sm:$0xff]
        %v766 = vld [vmem:[%s229 + $0x90] sm:$0xff]
        %v767 = vld [vmem:[%s229 + $0x98] sm:$0xff]
        %v768 = vld [vmem:[%s229 + $0xa8] sm:$0xff]
        %v769 = vld [vmem:[%s229 + $0xb0] sm:$0xff]
        %v770 = vld [vmem:[%s229 + $0xc0] sm:$0xff]
        %v771 = vld [vmem:[%s229 + $0xc8] sm:$0xff]
        %v772 = vld [vmem:[%s229 + $0xd8] sm:$0xff]
        %v773 = vld [vmem:[%s229 + $0xe0] sm:$0xff]
        %v774 = vld [vmem:[%s229 + $0xf0] sm:$0xff]
        %v775 = vld [vmem:[%s229 + $0xf8] sm:$0xff]
        %v776 = vld [vmem:[%s229 + $0x108] sm:$0xff]
        %v777 = vld [vmem:[%s229 + $0x110] sm:$0xff]
        %v778 = vld [vmem:[%s229 + $0x120] sm:$0xff]
        %v779 = vld [vmem:[%s229 + $0x128] sm:$0xff]
        %v780 = vld [vmem:[%s229 + $0x138] sm:$0xff]
        %v781 = vld [vmem:[%s229 + $0x140] sm:$0xff]
        %v782 = vld [vmem:[%s229 + $0x150] sm:$0xff]
        %v783 = vld [vmem:[%s229 + $0x158] sm:$0xff]
        %v784 = vld [vmem:[%s229 + $0x168] sm:$0xff]
        %v785 = vld [vmem:[%s229 + $0x170] sm:$0xff]
        %818 = vrot.lane.b32.xlu0 %v754, 12
        %v819 = vpop.permute.xlu0 %818
        %820 = vrot.lane.b32.xlu0 %v755, 12
        %v821 = vpop.permute.xlu0 %820
        %822 = vrot.lane.b32.xlu0 %v756, 12
        %v823 = vpop.permute.xlu0 %822
        %824 = vrot.lane.b32.xlu0 %v757, 12
        %v825 = vpop.permute.xlu0 %824
        %826 = vrot.lane.b32.xlu0 %v758, 12
        %v827 = vpop.permute.xlu0 %826
        %828 = vrot.lane.b32.xlu0 %v759, 12
        %v829 = vpop.permute.xlu0 %828
        %830 = vrot.lane.b32.xlu0 %v760, 12
        %v831 = vpop.permute.xlu0 %830
        %832 = vrot.lane.b32.xlu0 %v761, 12
        %v833 = vpop.permute.xlu0 %832
        %834 = vrot.lane.b32.xlu0 %v762, 12
        %v835 = vpop.permute.xlu0 %834
        %836 = vrot.lane.b32.xlu0 %v763, 12
        %v837 = vpop.permute.xlu0 %836
        %838 = vrot.lane.b32.xlu0 %v764, 12
        %v839 = vpop.permute.xlu0 %838
        %840 = vrot.lane.b32.xlu0 %v765, 12
        %v841 = vpop.permute.xlu0 %840
        %842 = vrot.lane.b32.xlu0 %v766, 12
        %v843 = vpop.permute.xlu0 %842
        %844 = vrot.lane.b32.xlu0 %v767, 12
        %v845 = vpop.permute.xlu0 %844
        %846 = vrot.lane.b32.xlu0 %v768, 12
        %v847 = vpop.permute.xlu0 %846
        %848 = vrot.lane.b32.xlu0 %v769, 12
        %v849 = vpop.permute.xlu0 %848
        %850 = vrot.lane.b32.xlu0 %v770, 12
        %v851 = vpop.permute.xlu0 %850
        %852 = vrot.lane.b32.xlu0 %v771, 12
        %v853 = vpop.permute.xlu0 %852
        %854 = vrot.lane.b32.xlu0 %v772, 12
        %v855 = vpop.permute.xlu0 %854
        %856 = vrot.lane.b32.xlu0 %v773, 12
        %v857 = vpop.permute.xlu0 %856
        %858 = vrot.lane.b32.xlu0 %v774, 12
        %v859 = vpop.permute.xlu0 %858
        %860 = vrot.lane.b32.xlu0 %v775, 12
        %v861 = vpop.permute.xlu0 %860
        %862 = vrot.lane.b32.xlu0 %v776, 12
        %v863 = vpop.permute.xlu0 %862
        %864 = vrot.lane.b32.xlu0 %v777, 12
        %v865 = vpop.permute.xlu0 %864
        %866 = vrot.lane.b32.xlu0 %v778, 12
        %v867 = vpop.permute.xlu0 %866
        %868 = vrot.lane.b32.xlu0 %v779, 12
        %v869 = vpop.permute.xlu0 %868
        %870 = vrot.lane.b32.xlu0 %v780, 12
        %v871 = vpop.permute.xlu0 %870
        %872 = vrot.lane.b32.xlu0 %v781, 12
        %v873 = vpop.permute.xlu0 %872
        %874 = vrot.lane.b32.xlu0 %v782, 12
        %v875 = vpop.permute.xlu0 %874
        %876 = vrot.lane.b32.xlu0 %v783, 12
        %v877 = vpop.permute.xlu0 %876
        %878 = vrot.lane.b32.xlu0 %v784, 12
        %v879 = vpop.permute.xlu0 %878
        %880 = vrot.lane.b32.xlu0 %v785, 12
        %v881 = vpop.permute.xlu0 %880
        %vm914 = vcmask 130144
        %915 = vst.msk [vmem:[#allocation3] sm:$0xff] %vm914, %v819
        %916 = vst.msk [vmem:[#allocation3 + $0x8] sm:$0xff] %vm914, %v821
        %917 = vst.msk [vmem:[#allocation3 + $0x10] sm:$0xff] %vm914, %v823
        %918 = vst.msk [vmem:[#allocation3 + $0x18] sm:$0xff] %vm914, %v825
        %919 = vst.msk [vmem:[#allocation3 + $0x20] sm:$0xff] %vm914, %v827
        %920 = vst.msk [vmem:[#allocation3 + $0x28] sm:$0xff] %vm914, %v829
        %921 = vst.msk [vmem:[#allocation3 + $0x30] sm:$0xff] %vm914, %v831
        %922 = vst.msk [vmem:[#allocation3 + $0x38] sm:$0xff] %vm914, %v833
        %923 = vst.msk [vmem:[#allocation3 + $0x40] sm:$0xff] %vm914, %v835
        %924 = vst.msk [vmem:[#allocation3 + $0x48] sm:$0xff] %vm914, %v837
        %925 = vst.msk [vmem:[#allocation3 + $0x50] sm:$0xff] %vm914, %v839
        %926 = vst.msk [vmem:[#allocation3 + $0x58] sm:$0xff] %vm914, %v841
        %927 = vst.msk [vmem:[#allocation3 + $0x60] sm:$0xff] %vm914, %v843
        %928 = vst.msk [vmem:[#allocation3 + $0x68] sm:$0xff] %vm914, %v845
        %929 = vst.msk [vmem:[#allocation3 + $0x70] sm:$0xff] %vm914, %v847
        %930 = vst.msk [vmem:[#allocation3 + $0x78] sm:$0xff] %vm914, %v849
        %931 = vst.msk [vmem:[#allocation3 + $0x80] sm:$0xff] %vm914, %v851
        %932 = vst.msk [vmem:[#allocation3 + $0x88] sm:$0xff] %vm914, %v853
        %933 = vst.msk [vmem:[#allocation3 + $0x90] sm:$0xff] %vm914, %v855
        %934 = vst.msk [vmem:[#allocation3 + $0x98] sm:$0xff] %vm914, %v857
        %935 = vst.msk [vmem:[#allocation3 + $0xa0] sm:$0xff] %vm914, %v859
        %936 = vst.msk [vmem:[#allocation3 + $0xa8] sm:$0xff] %vm914, %v861
        %937 = vst.msk [vmem:[#allocation3 + $0xb0] sm:$0xff] %vm914, %v863
        %938 = vst.msk [vmem:[#allocation3 + $0xb8] sm:$0xff] %vm914, %v865
        %939 = vst.msk [vmem:[#allocation3 + $0xc0] sm:$0xff] %vm914, %v867
        %940 = vst.msk [vmem:[#allocation3 + $0xc8] sm:$0xff] %vm914, %v869
        %941 = vst.msk [vmem:[#allocation3 + $0xd0] sm:$0xff] %vm914, %v871
        %942 = vst.msk [vmem:[#allocation3 + $0xd8] sm:$0xff] %vm914, %v873
        %943 = vst.msk [vmem:[#allocation3 + $0xe0] sm:$0xff] %vm914, %v875
        %944 = vst.msk [vmem:[#allocation3 + $0xe8] sm:$0xff] %vm914, %v877
        %945 = vst.msk [vmem:[#allocation3 + $0xf0] sm:$0xff] %vm914, %v879
        %946 = vst.msk [vmem:[#allocation3 + $0xf8] sm:$0xff] %vm914, %v881
        %v947 = vld [vmem:[%s229 + $0x1] sm:$0xff]
        %v948 = vld [vmem:[%s229 + $0x9] sm:$0xff]
        %v949 = vld [vmem:[%s229 + $0x19] sm:$0xff]
        %v950 = vld [vmem:[%s229 + $0x21] sm:$0xff]
        %v951 = vld [vmem:[%s229 + $0x31] sm:$0xff]
        %v952 = vld [vmem:[%s229 + $0x39] sm:$0xff]
        %v953 = vld [vmem:[%s229 + $0x49] sm:$0xff]
        %v954 = vld [vmem:[%s229 + $0x51] sm:$0xff]
        %v955 = vld [vmem:[%s229 + $0x61] sm:$0xff]
        %v956 = vld [vmem:[%s229 + $0x69] sm:$0xff]
        %v957 = vld [vmem:[%s229 + $0x79] sm:$0xff]
        %v958 = vld [vmem:[%s229 + $0x81] sm:$0xff]
        %v959 = vld [vmem:[%s229 + $0x91] sm:$0xff]
        %v960 = vld [vmem:[%s229 + $0x99] sm:$0xff]
        %v961 = vld [vmem:[%s229 + $0xa9] sm:$0xff]
        %v962 = vld [vmem:[%s229 + $0xb1] sm:$0xff]
        %v963 = vld [vmem:[%s229 + $0xc1] sm:$0xff]
        %v964 = vld [vmem:[%s229 + $0xc9] sm:$0xff]
        %v965 = vld [vmem:[%s229 + $0xd9] sm:$0xff]
        %v966 = vld [vmem:[%s229 + $0xe1] sm:$0xff]
        %v967 = vld [vmem:[%s229 + $0xf1] sm:$0xff]
        %v968 = vld [vmem:[%s229 + $0xf9] sm:$0xff]
        %v969 = vld [vmem:[%s229 + $0x109] sm:$0xff]
        %v970 = vld [vmem:[%s229 + $0x111] sm:$0xff]
        %v971 = vld [vmem:[%s229 + $0x121] sm:$0xff]
        %v972 = vld [vmem:[%s229 + $0x129] sm:$0xff]
        %v973 = vld [vmem:[%s229 + $0x139] sm:$0xff]
        %v974 = vld [vmem:[%s229 + $0x141] sm:$0xff]
        %v975 = vld [vmem:[%s229 + $0x151] sm:$0xff]
        %v976 = vld [vmem:[%s229 + $0x159] sm:$0xff]
        %v977 = vld [vmem:[%s229 + $0x169] sm:$0xff]
        %v978 = vld [vmem:[%s229 + $0x171] sm:$0xff]
        %1011 = vrot.lane.b32.xlu0 %v947, 16
        %v1012 = vpop.permute.xlu0 %1011
        %1013 = vrot.lane.b32.xlu0 %v948, 16
        %v1014 = vpop.permute.xlu0 %1013
        %1015 = vrot.lane.b32.xlu0 %v949, 16
        %v1016 = vpop.permute.xlu0 %1015
        %1017 = vrot.lane.b32.xlu0 %v950, 16
        %v1018 = vpop.permute.xlu0 %1017
        %1019 = vrot.lane.b32.xlu0 %v951, 16
        %v1020 = vpop.permute.xlu0 %1019
        %1021 = vrot.lane.b32.xlu0 %v952, 16
        %v1022 = vpop.permute.xlu0 %1021
        %1023 = vrot.lane.b32.xlu0 %v953, 16
        %v1024 = vpop.permute.xlu0 %1023
        %1025 = vrot.lane.b32.xlu0 %v954, 16
        %v1026 = vpop.permute.xlu0 %1025
        %1027 = vrot.lane.b32.xlu0 %v955, 16
        %v1028 = vpop.permute.xlu0 %1027
        %1029 = vrot.lane.b32.xlu0 %v956, 16
        %v1030 = vpop.permute.xlu0 %1029
        %1031 = vrot.lane.b32.xlu0 %v957, 16
        %v1032 = vpop.permute.xlu0 %1031
        %1033 = vrot.lane.b32.xlu0 %v958, 16
        %v1034 = vpop.permute.xlu0 %1033
        %1035 = vrot.lane.b32.xlu0 %v959, 16
        %v1036 = vpop.permute.xlu0 %1035
        %1037 = vrot.lane.b32.xlu0 %v960, 16
        %v1038 = vpop.permute.xlu0 %1037
        %1039 = vrot.lane.b32.xlu0 %v961, 16
        %v1040 = vpop.permute.xlu0 %1039
        %1041 = vrot.lane.b32.xlu0 %v962, 16
        %v1042 = vpop.permute.xlu0 %1041
        %1043 = vrot.lane.b32.xlu0 %v963, 16
        %v1044 = vpop.permute.xlu0 %1043
        %1045 = vrot.lane.b32.xlu0 %v964, 16
        %v1046 = vpop.permute.xlu0 %1045
        %1047 = vrot.lane.b32.xlu0 %v965, 16
        %v1048 = vpop.permute.xlu0 %1047
        %1049 = vrot.lane.b32.xlu0 %v966, 16
        %v1050 = vpop.permute.xlu0 %1049
        %1051 = vrot.lane.b32.xlu0 %v967, 16
        %v1052 = vpop.permute.xlu0 %1051
        %1053 = vrot.lane.b32.xlu0 %v968, 16
        %v1054 = vpop.permute.xlu0 %1053
        %1055 = vrot.lane.b32.xlu0 %v969, 16
        %v1056 = vpop.permute.xlu0 %1055
        %1057 = vrot.lane.b32.xlu0 %v970, 16
        %v1058 = vpop.permute.xlu0 %1057
        %1059 = vrot.lane.b32.xlu0 %v971, 16
        %v1060 = vpop.permute.xlu0 %1059
        %1061 = vrot.lane.b32.xlu0 %v972, 16
        %v1062 = vpop.permute.xlu0 %1061
        %1063 = vrot.lane.b32.xlu0 %v973, 16
        %v1064 = vpop.permute.xlu0 %1063
        %1065 = vrot.lane.b32.xlu0 %v974, 16
        %v1066 = vpop.permute.xlu0 %1065
        %1067 = vrot.lane.b32.xlu0 %v975, 16
        %v1068 = vpop.permute.xlu0 %1067
        %1069 = vrot.lane.b32.xlu0 %v976, 16
        %v1070 = vpop.permute.xlu0 %1069
        %1071 = vrot.lane.b32.xlu0 %v977, 16
        %v1072 = vpop.permute.xlu0 %1071
        %1073 = vrot.lane.b32.xlu0 %v978, 16
        %v1074 = vpop.permute.xlu0 %1073
        %vm1107 = vcmask 162944
        %1108 = vst.msk [vmem:[#allocation3] sm:$0xff] %vm1107, %v1012
        %1109 = vst.msk [vmem:[#allocation3 + $0x8] sm:$0xff] %vm1107, %v1014
        %1110 = vst.msk [vmem:[#allocation3 + $0x10] sm:$0xff] %vm1107, %v1016
        %1111 = vst.msk [vmem:[#allocation3 + $0x18] sm:$0xff] %vm1107, %v1018
        %1112 = vst.msk [vmem:[#allocation3 + $0x20] sm:$0xff] %vm1107, %v1020
        %1113 = vst.msk [vmem:[#allocation3 + $0x28] sm:$0xff] %vm1107, %v1022
        %1114 = vst.msk [vmem:[#allocation3 + $0x30] sm:$0xff] %vm1107, %v1024
        %1115 = vst.msk [vmem:[#allocation3 + $0x38] sm:$0xff] %vm1107, %v1026
        %1116 = vst.msk [vmem:[#allocation3 + $0x40] sm:$0xff] %vm1107, %v1028
        %1117 = vst.msk [vmem:[#allocation3 + $0x48] sm:$0xff] %vm1107, %v1030
        %1118 = vst.msk [vmem:[#allocation3 + $0x50] sm:$0xff] %vm1107, %v1032
        %1119 = vst.msk [vmem:[#allocation3 + $0x58] sm:$0xff] %vm1107, %v1034
        %1120 = vst.msk [vmem:[#allocation3 + $0x60] sm:$0xff] %vm1107, %v1036
        %1121 = vst.msk [vmem:[#allocation3 + $0x68] sm:$0xff] %vm1107, %v1038
        %1122 = vst.msk [vmem:[#allocation3 + $0x70] sm:$0xff] %vm1107, %v1040
        %1123 = vst.msk [vmem:[#allocation3 + $0x78] sm:$0xff] %vm1107, %v1042
        %1124 = vst.msk [vmem:[#allocation3 + $0x80] sm:$0xff] %vm1107, %v1044
        %1125 = vst.msk [vmem:[#allocation3 + $0x88] sm:$0xff] %vm1107, %v1046
        %1126 = vst.msk [vmem:[#allocation3 + $0x90] sm:$0xff] %vm1107, %v1048
        %1127 = vst.msk [vmem:[#allocation3 + $0x98] sm:$0xff] %vm1107, %v1050
        %1128 = vst.msk [vmem:[#allocation3 + $0xa0] sm:$0xff] %vm1107, %v1052
        %1129 = vst.msk [vmem:[#allocation3 + $0xa8] sm:$0xff] %vm1107, %v1054
        %1130 = vst.msk [vmem:[#allocation3 + $0xb0] sm:$0xff] %vm1107, %v1056
        %1131 = vst.msk [vmem:[#allocation3 + $0xb8] sm:$0xff] %vm1107, %v1058
        %1132 = vst.msk [vmem:[#allocation3 + $0xc0] sm:$0xff] %vm1107, %v1060
        %1133 = vst.msk [vmem:[#allocation3 + $0xc8] sm:$0xff] %vm1107, %v1062
        %1134 = vst.msk [vmem:[#allocation3 + $0xd0] sm:$0xff] %vm1107, %v1064
        %1135 = vst.msk [vmem:[#allocation3 + $0xd8] sm:$0xff] %vm1107, %v1066
        %1136 = vst.msk [vmem:[#allocation3 + $0xe0] sm:$0xff] %vm1107, %v1068
        %1137 = vst.msk [vmem:[#allocation3 + $0xe8] sm:$0xff] %vm1107, %v1070
        %1138 = vst.msk [vmem:[#allocation3 + $0xf0] sm:$0xff] %vm1107, %v1072
        %1139 = vst.msk [vmem:[#allocation3 + $0xf8] sm:$0xff] %vm1107, %v1074
        %v1140 = vld [vmem:[%s229 + $0x2] sm:$0xff]
        %v1141 = vld [vmem:[%s229 + $0xa] sm:$0xff]
        %v1142 = vld [vmem:[%s229 + $0x1a] sm:$0xff]
        %v1143 = vld [vmem:[%s229 + $0x22] sm:$0xff]
        %v1144 = vld [vmem:[%s229 + $0x32] sm:$0xff]
        %v1145 = vld [vmem:[%s229 + $0x3a] sm:$0xff]
        %v1146 = vld [vmem:[%s229 + $0x4a] sm:$0xff]
        %v1147 = vld [vmem:[%s229 + $0x52] sm:$0xff]
        %v1148 = vld [vmem:[%s229 + $0x62] sm:$0xff]
        %v1149 = vld [vmem:[%s229 + $0x6a] sm:$0xff]
        %v1150 = vld [vmem:[%s229 + $0x7a] sm:$0xff]
        %v1151 = vld [vmem:[%s229 + $0x82] sm:$0xff]
        %v1152 = vld [vmem:[%s229 + $0x92] sm:$0xff]
        %v1153 = vld [vmem:[%s229 + $0x9a] sm:$0xff]
        %v1154 = vld [vmem:[%s229 + $0xaa] sm:$0xff]
        %v1155 = vld [vmem:[%s229 + $0xb2] sm:$0xff]
        %v1156 = vld [vmem:[%s229 + $0xc2] sm:$0xff]
        %v1157 = vld [vmem:[%s229 + $0xca] sm:$0xff]
        %v1158 = vld [vmem:[%s229 + $0xda] sm:$0xff]
        %v1159 = vld [vmem:[%s229 + $0xe2] sm:$0xff]
        %v1160 = vld [vmem:[%s229 + $0xf2] sm:$0xff]
        %v1161 = vld [vmem:[%s229 + $0xfa] sm:$0xff]
        %v1162 = vld [vmem:[%s229 + $0x10a] sm:$0xff]
        %v1163 = vld [vmem:[%s229 + $0x112] sm:$0xff]
        %v1164 = vld [vmem:[%s229 + $0x122] sm:$0xff]
        %v1165 = vld [vmem:[%s229 + $0x12a] sm:$0xff]
        %v1166 = vld [vmem:[%s229 + $0x13a] sm:$0xff]
        %v1167 = vld [vmem:[%s229 + $0x142] sm:$0xff]
        %v1168 = vld [vmem:[%s229 + $0x152] sm:$0xff]
        %v1169 = vld [vmem:[%s229 + $0x15a] sm:$0xff]
        %v1170 = vld [vmem:[%s229 + $0x16a] sm:$0xff]
        %v1171 = vld [vmem:[%s229 + $0x172] sm:$0xff]
        %1204 = vrot.lane.b32.xlu0 %v1140, 20
        %v1205 = vpop.permute.xlu0 %1204
        %1206 = vrot.lane.b32.xlu0 %v1141, 20
        %v1207 = vpop.permute.xlu0 %1206
        %1208 = vrot.lane.b32.xlu0 %v1142, 20
        %v1209 = vpop.permute.xlu0 %1208
        %1210 = vrot.lane.b32.xlu0 %v1143, 20
        %v1211 = vpop.permute.xlu0 %1210
        %1212 = vrot.lane.b32.xlu0 %v1144, 20
        %v1213 = vpop.permute.xlu0 %1212
        %1214 = vrot.lane.b32.xlu0 %v1145, 20
        %v1215 = vpop.permute.xlu0 %1214
        %1216 = vrot.lane.b32.xlu0 %v1146, 20
        %v1217 = vpop.permute.xlu0 %1216
        %1218 = vrot.lane.b32.xlu0 %v1147, 20
        %v1219 = vpop.permute.xlu0 %1218
        %1220 = vrot.lane.b32.xlu0 %v1148, 20
        %v1221 = vpop.permute.xlu0 %1220
        %1222 = vrot.lane.b32.xlu0 %v1149, 20
        %v1223 = vpop.permute.xlu0 %1222
        %1224 = vrot.lane.b32.xlu0 %v1150, 20
        %v1225 = vpop.permute.xlu0 %1224
        %1226 = vrot.lane.b32.xlu0 %v1151, 20
        %v1227 = vpop.permute.xlu0 %1226
        %1228 = vrot.lane.b32.xlu0 %v1152, 20
        %v1229 = vpop.permute.xlu0 %1228
        %1230 = vrot.lane.b32.xlu0 %v1153, 20
        %v1231 = vpop.permute.xlu0 %1230
        %1232 = vrot.lane.b32.xlu0 %v1154, 20
        %v1233 = vpop.permute.xlu0 %1232
        %1234 = vrot.lane.b32.xlu0 %v1155, 20
        %v1235 = vpop.permute.xlu0 %1234
        %1236 = vrot.lane.b32.xlu0 %v1156, 20
        %v1237 = vpop.permute.xlu0 %1236
        %1238 = vrot.lane.b32.xlu0 %v1157, 20
        %v1239 = vpop.permute.xlu0 %1238
        %1240 = vrot.lane.b32.xlu0 %v1158, 20
        %v1241 = vpop.permute.xlu0 %1240
        %1242 = vrot.lane.b32.xlu0 %v1159, 20
        %v1243 = vpop.permute.xlu0 %1242
        %1244 = vrot.lane.b32.xlu0 %v1160, 20
        %v1245 = vpop.permute.xlu0 %1244
        %1246 = vrot.lane.b32.xlu0 %v1161, 20
        %v1247 = vpop.permute.xlu0 %1246
        %1248 = vrot.lane.b32.xlu0 %v1162, 20
        %v1249 = vpop.permute.xlu0 %1248
        %1250 = vrot.lane.b32.xlu0 %v1163, 20
        %v1251 = vpop.permute.xlu0 %1250
        %1252 = vrot.lane.b32.xlu0 %v1164, 20
        %v1253 = vpop.permute.xlu0 %1252
        %1254 = vrot.lane.b32.xlu0 %v1165, 20
        %v1255 = vpop.permute.xlu0 %1254
        %1256 = vrot.lane.b32.xlu0 %v1166, 20
        %v1257 = vpop.permute.xlu0 %1256
        %1258 = vrot.lane.b32.xlu0 %v1167, 20
        %v1259 = vpop.permute.xlu0 %1258
        %1260 = vrot.lane.b32.xlu0 %v1168, 20
        %v1261 = vpop.permute.xlu0 %1260
        %1262 = vrot.lane.b32.xlu0 %v1169, 20
        %v1263 = vpop.permute.xlu0 %1262
        %1264 = vrot.lane.b32.xlu0 %v1170, 20
        %v1265 = vpop.permute.xlu0 %1264
        %1266 = vrot.lane.b32.xlu0 %v1171, 20
        %v1267 = vpop.permute.xlu0 %1266
        %vm1300 = vcmask 195744
        %1301 = vst.msk [vmem:[#allocation3] sm:$0xff] %vm1300, %v1205
        %1302 = vst.msk [vmem:[#allocation3 + $0x8] sm:$0xff] %vm1300, %v1207
        %1303 = vst.msk [vmem:[#allocation3 + $0x10] sm:$0xff] %vm1300, %v1209
        %1304 = vst.msk [vmem:[#allocation3 + $0x18] sm:$0xff] %vm1300, %v1211
        %1305 = vst.msk [vmem:[#allocation3 + $0x20] sm:$0xff] %vm1300, %v1213
        %1306 = vst.msk [vmem:[#allocation3 + $0x28] sm:$0xff] %vm1300, %v1215
        %1307 = vst.msk [vmem:[#allocation3 + $0x30] sm:$0xff] %vm1300, %v1217
        %1308 = vst.msk [vmem:[#allocation3 + $0x38] sm:$0xff] %vm1300, %v1219
        %1309 = vst.msk [vmem:[#allocation3 + $0x40] sm:$0xff] %vm1300, %v1221
        %1310 = vst.msk [vmem:[#allocation3 + $0x48] sm:$0xff] %vm1300, %v1223
        %1311 = vst.msk [vmem:[#allocation3 + $0x50] sm:$0xff] %vm1300, %v1225
        %1312 = vst.msk [vmem:[#allocation3 + $0x58] sm:$0xff] %vm1300, %v1227
        %1313 = vst.msk [vmem:[#allocation3 + $0x60] sm:$0xff] %vm1300, %v1229
        %1314 = vst.msk [vmem:[#allocation3 + $0x68] sm:$0xff] %vm1300, %v1231
        %1315 = vst.msk [vmem:[#allocation3 + $0x70] sm:$0xff] %vm1300, %v1233
        %1316 = vst.msk [vmem:[#allocation3 + $0x78] sm:$0xff] %vm1300, %v1235
        %1317 = vst.msk [vmem:[#allocation3 + $0x80] sm:$0xff] %vm1300, %v1237
        %1318 = vst.msk [vmem:[#allocation3 + $0x88] sm:$0xff] %vm1300, %v1239
        %1319 = vst.msk [vmem:[#allocation3 + $0x90] sm:$0xff] %vm1300, %v1241
        %1320 = vst.msk [vmem:[#allocation3 + $0x98] sm:$0xff] %vm1300, %v1243
        %1321 = vst.msk [vmem:[#allocation3 + $0xa0] sm:$0xff] %vm1300, %v1245
        %1322 = vst.msk [vmem:[#allocation3 + $0xa8] sm:$0xff] %vm1300, %v1247
        %1323 = vst.msk [vmem:[#allocation3 + $0xb0] sm:$0xff] %vm1300, %v1249
        %1324 = vst.msk [vmem:[#allocation3 + $0xb8] sm:$0xff] %vm1300, %v1251
        %1325 = vst.msk [vmem:[#allocation3 + $0xc0] sm:$0xff] %vm1300, %v1253
        %1326 = vst.msk [vmem:[#allocation3 + $0xc8] sm:$0xff] %vm1300, %v1255
        %1327 = vst.msk [vmem:[#allocation3 + $0xd0] sm:$0xff] %vm1300, %v1257
        %1328 = vst.msk [vmem:[#allocation3 + $0xd8] sm:$0xff] %vm1300, %v1259
        %1329 = vst.msk [vmem:[#allocation3 + $0xe0] sm:$0xff] %vm1300, %v1261
        %1330 = vst.msk [vmem:[#allocation3 + $0xe8] sm:$0xff] %vm1300, %v1263
        %1331 = vst.msk [vmem:[#allocation3 + $0xf0] sm:$0xff] %vm1300, %v1265
        %1332 = vst.msk [vmem:[#allocation3 + $0xf8] sm:$0xff] %vm1300, %v1267
        %s1333 = scalar_lea.vmem [#allocation2], 48
        %v1334 = vld [vmem:[%s1333] sm:$0xff]
        %v1335 = vld [vmem:[%s1333 + $0x8] sm:$0xff]
        %v1336 = vld [vmem:[%s1333 + $0x18] sm:$0xff]
        %v1337 = vld [vmem:[%s1333 + $0x20] sm:$0xff]
        %v1338 = vld [vmem:[%s1333 + $0x30] sm:$0xff]
        %v1339 = vld [vmem:[%s1333 + $0x38] sm:$0xff]
        %v1340 = vld [vmem:[%s1333 + $0x48] sm:$0xff]
        %v1341 = vld [vmem:[%s1333 + $0x50] sm:$0xff]
        %v1342 = vld [vmem:[%s1333 + $0x60] sm:$0xff]
        %v1343 = vld [vmem:[%s1333 + $0x68] sm:$0xff]
        %v1344 = vld [vmem:[%s1333 + $0x78] sm:$0xff]
        %v1345 = vld [vmem:[%s1333 + $0x80] sm:$0xff]
        %v1346 = vld [vmem:[%s1333 + $0x90] sm:$0xff]
        %v1347 = vld [vmem:[%s1333 + $0x98] sm:$0xff]
        %v1348 = vld [vmem:[%s1333 + $0xa8] sm:$0xff]
        %v1349 = vld [vmem:[%s1333 + $0xb0] sm:$0xff]
        %v1350 = vld [vmem:[%s1333 + $0xc0] sm:$0xff]
        %v1351 = vld [vmem:[%s1333 + $0xc8] sm:$0xff]
        %v1352 = vld [vmem:[%s1333 + $0xd8] sm:$0xff]
        %v1353 = vld [vmem:[%s1333 + $0xe0] sm:$0xff]
        %v1354 = vld [vmem:[%s1333 + $0xf0] sm:$0xff]
        %v1355 = vld [vmem:[%s1333 + $0xf8] sm:$0xff]
        %v1356 = vld [vmem:[%s1333 + $0x108] sm:$0xff]
        %v1357 = vld [vmem:[%s1333 + $0x110] sm:$0xff]
        %v1358 = vld [vmem:[%s1333 + $0x120] sm:$0xff]
        %v1359 = vld [vmem:[%s1333 + $0x128] sm:$0xff]
        %v1360 = vld [vmem:[%s1333 + $0x138] sm:$0xff]
        %v1361 = vld [vmem:[%s1333 + $0x140] sm:$0xff]
        %v1362 = vld [vmem:[%s1333 + $0x150] sm:$0xff]
        %v1363 = vld [vmem:[%s1333 + $0x158] sm:$0xff]
        %v1364 = vld [vmem:[%s1333 + $0x168] sm:$0xff]
        %v1365 = vld [vmem:[%s1333 + $0x170] sm:$0xff]
        %1398 = vrot.lane.b32.xlu0 %v1334, 24
        %v1399 = vpop.permute.xlu0 %1398
        %1400 = vrot.lane.b32.xlu0 %v1335, 24
        %v1401 = vpop.permute.xlu0 %1400
        %1402 = vrot.lane.b32.xlu0 %v1336, 24
        %v1403 = vpop.permute.xlu0 %1402
        %1404 = vrot.lane.b32.xlu0 %v1337, 24
        %v1405 = vpop.permute.xlu0 %1404
        %1406 = vrot.lane.b32.xlu0 %v1338, 24
        %v1407 = vpop.permute.xlu0 %1406
        %1408 = vrot.lane.b32.xlu0 %v1339, 24
        %v1409 = vpop.permute.xlu0 %1408
        %1410 = vrot.lane.b32.xlu0 %v1340, 24
        %v1411 = vpop.permute.xlu0 %1410
        %1412 = vrot.lane.b32.xlu0 %v1341, 24
        %v1413 = vpop.permute.xlu0 %1412
        %1414 = vrot.lane.b32.xlu0 %v1342, 24
        %v1415 = vpop.permute.xlu0 %1414
        %1416 = vrot.lane.b32.xlu0 %v1343, 24
        %v1417 = vpop.permute.xlu0 %1416
        %1418 = vrot.lane.b32.xlu0 %v1344, 24
        %v1419 = vpop.permute.xlu0 %1418
        %1420 = vrot.lane.b32.xlu0 %v1345, 24
        %v1421 = vpop.permute.xlu0 %1420
        %1422 = vrot.lane.b32.xlu0 %v1346, 24
        %v1423 = vpop.permute.xlu0 %1422
        %1424 = vrot.lane.b32.xlu0 %v1347, 24
        %v1425 = vpop.permute.xlu0 %1424
        %1426 = vrot.lane.b32.xlu0 %v1348, 24
        %v1427 = vpop.permute.xlu0 %1426
        %1428 = vrot.lane.b32.xlu0 %v1349, 24
        %v1429 = vpop.permute.xlu0 %1428
        %1430 = vrot.lane.b32.xlu0 %v1350, 24
        %v1431 = vpop.permute.xlu0 %1430
        %1432 = vrot.lane.b32.xlu0 %v1351, 24
        %v1433 = vpop.permute.xlu0 %1432
        %1434 = vrot.lane.b32.xlu0 %v1352, 24
        %v1435 = vpop.permute.xlu0 %1434
        %1436 = vrot.lane.b32.xlu0 %v1353, 24
        %v1437 = vpop.permute.xlu0 %1436
        %1438 = vrot.lane.b32.xlu0 %v1354, 24
        %v1439 = vpop.permute.xlu0 %1438
        %1440 = vrot.lane.b32.xlu0 %v1355, 24
        %v1441 = vpop.permute.xlu0 %1440
        %1442 = vrot.lane.b32.xlu0 %v1356, 24
        %v1443 = vpop.permute.xlu0 %1442
        %1444 = vrot.lane.b32.xlu0 %v1357, 24
        %v1445 = vpop.permute.xlu0 %1444
        %1446 = vrot.lane.b32.xlu0 %v1358, 24
        %v1447 = vpop.permute.xlu0 %1446
        %1448 = vrot.lane.b32.xlu0 %v1359, 24
        %v1449 = vpop.permute.xlu0 %1448
        %1450 = vrot.lane.b32.xlu0 %v1360, 24
        %v1451 = vpop.permute.xlu0 %1450
        %1452 = vrot.lane.b32.xlu0 %v1361, 24
        %v1453 = vpop.permute.xlu0 %1452
        %1454 = vrot.lane.b32.xlu0 %v1362, 24
        %v1455 = vpop.permute.xlu0 %1454
        %1456 = vrot.lane.b32.xlu0 %v1363, 24
        %v1457 = vpop.permute.xlu0 %1456
        %1458 = vrot.lane.b32.xlu0 %v1364, 24
        %v1459 = vpop.permute.xlu0 %1458
        %1460 = vrot.lane.b32.xlu0 %v1365, 24
        %v1461 = vpop.permute.xlu0 %1460
        %vm1494 = vcmask 228544
        %1495 = vst.msk [vmem:[#allocation3] sm:$0xff] %vm1494, %v1399
        %1496 = vst.msk [vmem:[#allocation3 + $0x8] sm:$0xff] %vm1494, %v1401
        %1497 = vst.msk [vmem:[#allocation3 + $0x10] sm:$0xff] %vm1494, %v1403
        %1498 = vst.msk [vmem:[#allocation3 + $0x18] sm:$0xff] %vm1494, %v1405
        %1499 = vst.msk [vmem:[#allocation3 + $0x20] sm:$0xff] %vm1494, %v1407
        %1500 = vst.msk [vmem:[#allocation3 + $0x28] sm:$0xff] %vm1494, %v1409
        %1501 = vst.msk [vmem:[#allocation3 + $0x30] sm:$0xff] %vm1494, %v1411
        %1502 = vst.msk [vmem:[#allocation3 + $0x38] sm:$0xff] %vm1494, %v1413
        %1503 = vst.msk [vmem:[#allocation3 + $0x40] sm:$0xff] %vm1494, %v1415
        %1504 = vst.msk [vmem:[#allocation3 + $0x48] sm:$0xff] %vm1494, %v1417
        %1505 = vst.msk [vmem:[#allocation3 + $0x50] sm:$0xff] %vm1494, %v1419
        %1506 = vst.msk [vmem:[#allocation3 + $0x58] sm:$0xff] %vm1494, %v1421
        %1507 = vst.msk [vmem:[#allocation3 + $0x60] sm:$0xff] %vm1494, %v1423
        %1508 = vst.msk [vmem:[#allocation3 + $0x68] sm:$0xff] %vm1494, %v1425
        %1509 = vst.msk [vmem:[#allocation3 + $0x70] sm:$0xff] %vm1494, %v1427
        %1510 = vst.msk [vmem:[#allocation3 + $0x78] sm:$0xff] %vm1494, %v1429
        %1511 = vst.msk [vmem:[#allocation3 + $0x80] sm:$0xff] %vm1494, %v1431
        %1512 = vst.msk [vmem:[#allocation3 + $0x88] sm:$0xff] %vm1494, %v1433
        %1513 = vst.msk [vmem:[#allocation3 + $0x90] sm:$0xff] %vm1494, %v1435
        %1514 = vst.msk [vmem:[#allocation3 + $0x98] sm:$0xff] %vm1494, %v1437
        %1515 = vst.msk [vmem:[#allocation3 + $0xa0] sm:$0xff] %vm1494, %v1439
        %1516 = vst.msk [vmem:[#allocation3 + $0xa8] sm:$0xff] %vm1494, %v1441
        %1517 = vst.msk [vmem:[#allocation3 + $0xb0] sm:$0xff] %vm1494, %v1443
        %1518 = vst.msk [vmem:[#allocation3 + $0xb8] sm:$0xff] %vm1494, %v1445
        %1519 = vst.msk [vmem:[#allocation3 + $0xc0] sm:$0xff] %vm1494, %v1447
        %1520 = vst.msk [vmem:[#allocation3 + $0xc8] sm:$0xff] %vm1494, %v1449
        %1521 = vst.msk [vmem:[#allocation3 + $0xd0] sm:$0xff] %vm1494, %v1451
        %1522 = vst.msk [vmem:[#allocation3 + $0xd8] sm:$0xff] %vm1494, %v1453
        %1523 = vst.msk [vmem:[#allocation3 + $0xe0] sm:$0xff] %vm1494, %v1455
        %1524 = vst.msk [vmem:[#allocation3 + $0xe8] sm:$0xff] %vm1494, %v1457
        %1525 = vst.msk [vmem:[#allocation3 + $0xf0] sm:$0xff] %vm1494, %v1459
        %1526 = vst.msk [vmem:[#allocation3 + $0xf8] sm:$0xff] %vm1494, %v1461
        %v1527 = vld [vmem:[%s1333 + $0x1] sm:$0xff]
        %v1528 = vld [vmem:[%s1333 + $0x9] sm:$0xff]
        %v1529 = vld [vmem:[%s1333 + $0x19] sm:$0xff]
        %v1530 = vld [vmem:[%s1333 + $0x21] sm:$0xff]
        %v1531 = vld [vmem:[%s1333 + $0x31] sm:$0xff]
        %v1532 = vld [vmem:[%s1333 + $0x39] sm:$0xff]
        %v1533 = vld [vmem:[%s1333 + $0x49] sm:$0xff]
        %v1534 = vld [vmem:[%s1333 + $0x51] sm:$0xff]
        %v1535 = vld [vmem:[%s1333 + $0x61] sm:$0xff]
        %v1536 = vld [vmem:[%s1333 + $0x69] sm:$0xff]
        %v1537 = vld [vmem:[%s1333 + $0x79] sm:$0xff]
        %v1538 = vld [vmem:[%s1333 + $0x81] sm:$0xff]
        %v1539 = vld [vmem:[%s1333 + $0x91] sm:$0xff]
        %v1540 = vld [vmem:[%s1333 + $0x99] sm:$0xff]
        %v1541 = vld [vmem:[%s1333 + $0xa9] sm:$0xff]
        %v1542 = vld [vmem:[%s1333 + $0xb1] sm:$0xff]
        %v1543 = vld [vmem:[%s1333 + $0xc1] sm:$0xff]
        %v1544 = vld [vmem:[%s1333 + $0xc9] sm:$0xff]
        %v1545 = vld [vmem:[%s1333 + $0xd9] sm:$0xff]
        %v1546 = vld [vmem:[%s1333 + $0xe1] sm:$0xff]
        %v1547 = vld [vmem:[%s1333 + $0xf1] sm:$0xff]
        %v1548 = vld [vmem:[%s1333 + $0xf9] sm:$0xff]
        %v1549 = vld [vmem:[%s1333 + $0x109] sm:$0xff]
        %v1550 = vld [vmem:[%s1333 + $0x111] sm:$0xff]
        %v1551 = vld [vmem:[%s1333 + $0x121] sm:$0xff]
        %v1552 = vld [vmem:[%s1333 + $0x129] sm:$0xff]
        %v1553 = vld [vmem:[%s1333 + $0x139] sm:$0xff]
        %v1554 = vld [vmem:[%s1333 + $0x141] sm:$0xff]
        %v1555 = vld [vmem:[%s1333 + $0x151] sm:$0xff]
        %v1556 = vld [vmem:[%s1333 + $0x159] sm:$0xff]
        %v1557 = vld [vmem:[%s1333 + $0x169] sm:$0xff]
        %v1558 = vld [vmem:[%s1333 + $0x171] sm:$0xff]
        %1591 = vrot.lane.b32.xlu0 %v1527, 28
        %v1592 = vpop.permute.xlu0 %1591
        %1593 = vrot.lane.b32.xlu0 %v1528, 28
        %v1594 = vpop.permute.xlu0 %1593
        %1595 = vrot.lane.b32.xlu0 %v1529, 28
        %v1596 = vpop.permute.xlu0 %1595
        %1597 = vrot.lane.b32.xlu0 %v1530, 28
        %v1598 = vpop.permute.xlu0 %1597
        %1599 = vrot.lane.b32.xlu0 %v1531, 28
        %v1600 = vpop.permute.xlu0 %1599
        %1601 = vrot.lane.b32.xlu0 %v1532, 28
        %v1602 = vpop.permute.xlu0 %1601
        %1603 = vrot.lane.b32.xlu0 %v1533, 28
        %v1604 = vpop.permute.xlu0 %1603
        %1605 = vrot.lane.b32.xlu0 %v1534, 28
        %v1606 = vpop.permute.xlu0 %1605
        %1607 = vrot.lane.b32.xlu0 %v1535, 28
        %v1608 = vpop.permute.xlu0 %1607
        %1609 = vrot.lane.b32.xlu0 %v1536, 28
        %v1610 = vpop.permute.xlu0 %1609
        %1611 = vrot.lane.b32.xlu0 %v1537, 28
        %v1612 = vpop.permute.xlu0 %1611
        %1613 = vrot.lane.b32.xlu0 %v1538, 28
        %v1614 = vpop.permute.xlu0 %1613
        %1615 = vrot.lane.b32.xlu0 %v1539, 28
        %v1616 = vpop.permute.xlu0 %1615
        %1617 = vrot.lane.b32.xlu0 %v1540, 28
        %v1618 = vpop.permute.xlu0 %1617
        %1619 = vrot.lane.b32.xlu0 %v1541, 28
        %v1620 = vpop.permute.xlu0 %1619
        %1621 = vrot.lane.b32.xlu0 %v1542, 28
        %v1622 = vpop.permute.xlu0 %1621
        %1623 = vrot.lane.b32.xlu0 %v1543, 28
        %v1624 = vpop.permute.xlu0 %1623
        %1625 = vrot.lane.b32.xlu0 %v1544, 28
        %v1626 = vpop.permute.xlu0 %1625
        %1627 = vrot.lane.b32.xlu0 %v1545, 28
        %v1628 = vpop.permute.xlu0 %1627
        %1629 = vrot.lane.b32.xlu0 %v1546, 28
        %v1630 = vpop.permute.xlu0 %1629
        %1631 = vrot.lane.b32.xlu0 %v1547, 28
        %v1632 = vpop.permute.xlu0 %1631
        %1633 = vrot.lane.b32.xlu0 %v1548, 28
        %v1634 = vpop.permute.xlu0 %1633
        %1635 = vrot.lane.b32.xlu0 %v1549, 28
        %v1636 = vpop.permute.xlu0 %1635
        %1637 = vrot.lane.b32.xlu0 %v1550, 28
        %v1638 = vpop.permute.xlu0 %1637
        %1639 = vrot.lane.b32.xlu0 %v1551, 28
        %v1640 = vpop.permute.xlu0 %1639
        %1641 = vrot.lane.b32.xlu0 %v1552, 28
        %v1642 = vpop.permute.xlu0 %1641
        %1643 = vrot.lane.b32.xlu0 %v1553, 28
        %v1644 = vpop.permute.xlu0 %1643
        %1645 = vrot.lane.b32.xlu0 %v1554, 28
        %v1646 = vpop.permute.xlu0 %1645
        %1647 = vrot.lane.b32.xlu0 %v1555, 28
        %v1648 = vpop.permute.xlu0 %1647
        %1649 = vrot.lane.b32.xlu0 %v1556, 28
        %v1650 = vpop.permute.xlu0 %1649
        %1651 = vrot.lane.b32.xlu0 %v1557, 28
        %v1652 = vpop.permute.xlu0 %1651
        %1653 = vrot.lane.b32.xlu0 %v1558, 28
        %v1654 = vpop.permute.xlu0 %1653
        %vm1687 = vcmask 261344
        %1688 = vst.msk [vmem:[#allocation3] sm:$0xff] %vm1687, %v1592
        %1689 = vst.msk [vmem:[#allocation3 + $0x8] sm:$0xff] %vm1687, %v1594
        %1690 = vst.msk [vmem:[#allocation3 + $0x10] sm:$0xff] %vm1687, %v1596
        %1691 = vst.msk [vmem:[#allocation3 + $0x18] sm:$0xff] %vm1687, %v1598
        %1692 = vst.msk [vmem:[#allocation3 + $0x20] sm:$0xff] %vm1687, %v1600
        %1693 = vst.msk [vmem:[#allocation3 + $0x28] sm:$0xff] %vm1687, %v1602
        %1694 = vst.msk [vmem:[#allocation3 + $0x30] sm:$0xff] %vm1687, %v1604
        %1695 = vst.msk [vmem:[#allocation3 + $0x38] sm:$0xff] %vm1687, %v1606
        %1696 = vst.msk [vmem:[#allocation3 + $0x40] sm:$0xff] %vm1687, %v1608
        %1697 = vst.msk [vmem:[#allocation3 + $0x48] sm:$0xff] %vm1687, %v1610
        %1698 = vst.msk [vmem:[#allocation3 + $0x50] sm:$0xff] %vm1687, %v1612
        %1699 = vst.msk [vmem:[#allocation3 + $0x58] sm:$0xff] %vm1687, %v1614
        %1700 = vst.msk [vmem:[#allocation3 + $0x60] sm:$0xff] %vm1687, %v1616
        %1701 = vst.msk [vmem:[#allocation3 + $0x68] sm:$0xff] %vm1687, %v1618
        %1702 = vst.msk [vmem:[#allocation3 + $0x70] sm:$0xff] %vm1687, %v1620
        %1703 = vst.msk [vmem:[#allocation3 + $0x78] sm:$0xff] %vm1687, %v1622
        %1704 = vst.msk [vmem:[#allocation3 + $0x80] sm:$0xff] %vm1687, %v1624
        %1705 = vst.msk [vmem:[#allocation3 + $0x88] sm:$0xff] %vm1687, %v1626
        %1706 = vst.msk [vmem:[#allocation3 + $0x90] sm:$0xff] %vm1687, %v1628
        %1707 = vst.msk [vmem:[#allocation3 + $0x98] sm:$0xff] %vm1687, %v1630
        %1708 = vst.msk [vmem:[#allocation3 + $0xa0] sm:$0xff] %vm1687, %v1632
        %1709 = vst.msk [vmem:[#allocation3 + $0xa8] sm:$0xff] %vm1687, %v1634
        %1710 = vst.msk [vmem:[#allocation3 + $0xb0] sm:$0xff] %vm1687, %v1636
        %1711 = vst.msk [vmem:[#allocation3 + $0xb8] sm:$0xff] %vm1687, %v1638
        %1712 = vst.msk [vmem:[#allocation3 + $0xc0] sm:$0xff] %vm1687, %v1640
        %1713 = vst.msk [vmem:[#allocation3 + $0xc8] sm:$0xff] %vm1687, %v1642
        %1714 = vst.msk [vmem:[#allocation3 + $0xd0] sm:$0xff] %vm1687, %v1644
        %1715 = vst.msk [vmem:[#allocation3 + $0xd8] sm:$0xff] %vm1687, %v1646
        %1716 = vst.msk [vmem:[#allocation3 + $0xe0] sm:$0xff] %vm1687, %v1648
        %1717 = vst.msk [vmem:[#allocation3 + $0xe8] sm:$0xff] %vm1687, %v1650
        %1718 = vst.msk [vmem:[#allocation3 + $0xf0] sm:$0xff] %vm1687, %v1652
        %1719 = vst.msk [vmem:[#allocation3 + $0xf8] sm:$0xff] %vm1687, %v1654
        %v1720 = vld [vmem:[%s1333 + $0x2] sm:$0xff]
        %v1721 = vld [vmem:[%s1333 + $0xa] sm:$0xff]
        %v1722 = vld [vmem:[%s1333 + $0x1a] sm:$0xff]
        %v1723 = vld [vmem:[%s1333 + $0x22] sm:$0xff]
        %v1724 = vld [vmem:[%s1333 + $0x32] sm:$0xff]
        %v1725 = vld [vmem:[%s1333 + $0x3a] sm:$0xff]
        %v1726 = vld [vmem:[%s1333 + $0x4a] sm:$0xff]
        %v1727 = vld [vmem:[%s1333 + $0x52] sm:$0xff]
        %v1728 = vld [vmem:[%s1333 + $0x62] sm:$0xff]
        %v1729 = vld [vmem:[%s1333 + $0x6a] sm:$0xff]
        %v1730 = vld [vmem:[%s1333 + $0x7a] sm:$0xff]
        %v1731 = vld [vmem:[%s1333 + $0x82] sm:$0xff]
        %v1732 = vld [vmem:[%s1333 + $0x92] sm:$0xff]
        %v1733 = vld [vmem:[%s1333 + $0x9a] sm:$0xff]
        %v1734 = vld [vmem:[%s1333 + $0xaa] sm:$0xff]
        %v1735 = vld [vmem:[%s1333 + $0xb2] sm:$0xff]
        %v1736 = vld [vmem:[%s1333 + $0xc2] sm:$0xff]
        %v1737 = vld [vmem:[%s1333 + $0xca] sm:$0xff]
        %v1738 = vld [vmem:[%s1333 + $0xda] sm:$0xff]
        %v1739 = vld [vmem:[%s1333 + $0xe2] sm:$0xff]
        %v1740 = vld [vmem:[%s1333 + $0xf2] sm:$0xff]
        %v1741 = vld [vmem:[%s1333 + $0xfa] sm:$0xff]
        %v1742 = vld [vmem:[%s1333 + $0x10a] sm:$0xff]
        %v1743 = vld [vmem:[%s1333 + $0x112] sm:$0xff]
        %v1744 = vld [vmem:[%s1333 + $0x122] sm:$0xff]
        %v1745 = vld [vmem:[%s1333 + $0x12a] sm:$0xff]
        %v1746 = vld [vmem:[%s1333 + $0x13a] sm:$0xff]
        %v1747 = vld [vmem:[%s1333 + $0x142] sm:$0xff]
        %v1748 = vld [vmem:[%s1333 + $0x152] sm:$0xff]
        %v1749 = vld [vmem:[%s1333 + $0x15a] sm:$0xff]
        %v1750 = vld [vmem:[%s1333 + $0x16a] sm:$0xff]
        %v1751 = vld [vmem:[%s1333 + $0x172] sm:$0xff]
        %1784 = vrot.lane.b32.xlu0 %v1720, 32
        %v1785 = vpop.permute.xlu0 %1784
        %1786 = vrot.lane.b32.xlu0 %v1721, 32
        %v1787 = vpop.permute.xlu0 %1786
        %1788 = vrot.lane.b32.xlu0 %v1722, 32
        %v1789 = vpop.permute.xlu0 %1788
        %1790 = vrot.lane.b32.xlu0 %v1723, 32
        %v1791 = vpop.permute.xlu0 %1790
        %1792 = vrot.lane.b32.xlu0 %v1724, 32
        %v1793 = vpop.permute.xlu0 %1792
        %1794 = vrot.lane.b32.xlu0 %v1725, 32
        %v1795 = vpop.permute.xlu0 %1794
        %1796 = vrot.lane.b32.xlu0 %v1726, 32
        %v1797 = vpop.permute.xlu0 %1796
        %1798 = vrot.lane.b32.xlu0 %v1727, 32
        %v1799 = vpop.permute.xlu0 %1798
        %1800 = vrot.lane.b32.xlu0 %v1728, 32
        %v1801 = vpop.permute.xlu0 %1800
        %1802 = vrot.lane.b32.xlu0 %v1729, 32
        %v1803 = vpop.permute.xlu0 %1802
        %1804 = vrot.lane.b32.xlu0 %v1730, 32
        %v1805 = vpop.permute.xlu0 %1804
        %1806 = vrot.lane.b32.xlu0 %v1731, 32
        %v1807 = vpop.permute.xlu0 %1806
        %1808 = vrot.lane.b32.xlu0 %v1732, 32
        %v1809 = vpop.permute.xlu0 %1808
        %1810 = vrot.lane.b32.xlu0 %v1733, 32
        %v1811 = vpop.permute.xlu0 %1810
        %1812 = vrot.lane.b32.xlu0 %v1734, 32
        %v1813 = vpop.permute.xlu0 %1812
        %1814 = vrot.lane.b32.xlu0 %v1735, 32
        %v1815 = vpop.permute.xlu0 %1814
        %1816 = vrot.lane.b32.xlu0 %v1736, 32
        %v1817 = vpop.permute.xlu0 %1816
        %1818 = vrot.lane.b32.xlu0 %v1737, 32
        %v1819 = vpop.permute.xlu0 %1818
        %1820 = vrot.lane.b32.xlu0 %v1738, 32
        %v1821 = vpop.permute.xlu0 %1820
        %1822 = vrot.lane.b32.xlu0 %v1739, 32
        %v1823 = vpop.permute.xlu0 %1822
        %1824 = vrot.lane.b32.xlu0 %v1740, 32
        %v1825 = vpop.permute.xlu0 %1824
        %1826 = vrot.lane.b32.xlu0 %v1741, 32
        %v1827 = vpop.permute.xlu0 %1826
        %1828 = vrot.lane.b32.xlu0 %v1742, 32
        %v1829 = vpop.permute.xlu0 %1828
        %1830 = vrot.lane.b32.xlu0 %v1743, 32
        %v1831 = vpop.permute.xlu0 %1830
        %1832 = vrot.lane.b32.xlu0 %v1744, 32
        %v1833 = vpop.permute.xlu0 %1832
        %1834 = vrot.lane.b32.xlu0 %v1745, 32
        %v1835 = vpop.permute.xlu0 %1834
        %1836 = vrot.lane.b32.xlu0 %v1746, 32
        %v1837 = vpop.permute.xlu0 %1836
        %1838 = vrot.lane.b32.xlu0 %v1747, 32
        %v1839 = vpop.permute.xlu0 %1838
        %1840 = vrot.lane.b32.xlu0 %v1748, 32
        %v1841 = vpop.permute.xlu0 %1840
        %1842 = vrot.lane.b32.xlu0 %v1749, 32
        %v1843 = vpop.permute.xlu0 %1842
        %1844 = vrot.lane.b32.xlu0 %v1750, 32
        %v1845 = vpop.permute.xlu0 %1844
        %1846 = vrot.lane.b32.xlu0 %v1751, 32
        %v1847 = vpop.permute.xlu0 %1846
        %vm1880 = vcmask 294144
        %1881 = vst.msk [vmem:[#allocation3] sm:$0xff] %vm1880, %v1785
        %1882 = vst.msk [vmem:[#allocation3 + $0x8] sm:$0xff] %vm1880, %v1787
        %1883 = vst.msk [vmem:[#allocation3 + $0x10] sm:$0xff] %vm1880, %v1789
        %1884 = vst.msk [vmem:[#allocation3 + $0x18] sm:$0xff] %vm1880, %v1791
        %1885 = vst.msk [vmem:[#allocation3 + $0x20] sm:$0xff] %vm1880, %v1793
        %1886 = vst.msk [vmem:[#allocation3 + $0x28] sm:$0xff] %vm1880, %v1795
        %1887 = vst.msk [vmem:[#allocation3 + $0x30] sm:$0xff] %vm1880, %v1797
        %1888 = vst.msk [vmem:[#allocation3 + $0x38] sm:$0xff] %vm1880, %v1799
        %1889 = vst.msk [vmem:[#allocation3 + $0x40] sm:$0xff] %vm1880, %v1801
        %1890 = vst.msk [vmem:[#allocation3 + $0x48] sm:$0xff] %vm1880, %v1803
        %1891 = vst.msk [vmem:[#allocation3 + $0x50] sm:$0xff] %vm1880, %v1805
        %1892 = vst.msk [vmem:[#allocation3 + $0x58] sm:$0xff] %vm1880, %v1807
        %1893 = vst.msk [vmem:[#allocation3 + $0x60] sm:$0xff] %vm1880, %v1809
        %1894 = vst.msk [vmem:[#allocation3 + $0x68] sm:$0xff] %vm1880, %v1811
        %1895 = vst.msk [vmem:[#allocation3 + $0x70] sm:$0xff] %vm1880, %v1813
        %1896 = vst.msk [vmem:[#allocation3 + $0x78] sm:$0xff] %vm1880, %v1815
        %1897 = vst.msk [vmem:[#allocation3 + $0x80] sm:$0xff] %vm1880, %v1817
        %1898 = vst.msk [vmem:[#allocation3 + $0x88] sm:$0xff] %vm1880, %v1819
        %1899 = vst.msk [vmem:[#allocation3 + $0x90] sm:$0xff] %vm1880, %v1821
        %1900 = vst.msk [vmem:[#allocation3 + $0x98] sm:$0xff] %vm1880, %v1823
        %1901 = vst.msk [vmem:[#allocation3 + $0xa0] sm:$0xff] %vm1880, %v1825
        %1902 = vst.msk [vmem:[#allocation3 + $0xa8] sm:$0xff] %vm1880, %v1827
        %1903 = vst.msk [vmem:[#allocation3 + $0xb0] sm:$0xff] %vm1880, %v1829
        %1904 = vst.msk [vmem:[#allocation3 + $0xb8] sm:$0xff] %vm1880, %v1831
        %1905 = vst.msk [vmem:[#allocation3 + $0xc0] sm:$0xff] %vm1880, %v1833
        %1906 = vst.msk [vmem:[#allocation3 + $0xc8] sm:$0xff] %vm1880, %v1835
        %1907 = vst.msk [vmem:[#allocation3 + $0xd0] sm:$0xff] %vm1880, %v1837
        %1908 = vst.msk [vmem:[#allocation3 + $0xd8] sm:$0xff] %vm1880, %v1839
        %1909 = vst.msk [vmem:[#allocation3 + $0xe0] sm:$0xff] %vm1880, %v1841
        %1910 = vst.msk [vmem:[#allocation3 + $0xe8] sm:$0xff] %vm1880, %v1843
        %1911 = vst.msk [vmem:[#allocation3 + $0xf0] sm:$0xff] %vm1880, %v1845
        %1912 = vst.msk [vmem:[#allocation3 + $0xf8] sm:$0xff] %vm1880, %v1847
        %v1913 = vld [vmem:[#allocation3] sm:$0xff]
        %v1914 = vld [vmem:[#allocation3 + $0x8] sm:$0xff]
        %v1915 = vld [vmem:[#allocation3 + $0x10] sm:$0xff]
        %v1916 = vld [vmem:[#allocation3 + $0x18] sm:$0xff]
        %v1917 = vld [vmem:[#allocation3 + $0x20] sm:$0xff]
        %v1918 = vld [vmem:[#allocation3 + $0x28] sm:$0xff]
        %v1919 = vld [vmem:[#allocation3 + $0x30] sm:$0xff]
        %v1920 = vld [vmem:[#allocation3 + $0x38] sm:$0xff]
        %v1921 = vld [vmem:[#allocation3 + $0x40] sm:$0xff]
        %v1922 = vld [vmem:[#allocation3 + $0x48] sm:$0xff]
        %v1923 = vld [vmem:[#allocation3 + $0x50] sm:$0xff]
        %v1924 = vld [vmem:[#allocation3 + $0x58] sm:$0xff]
        %v1925 = vld [vmem:[#allocation3 + $0x60] sm:$0xff]
        %v1926 = vld [vmem:[#allocation3 + $0x68] sm:$0xff]
        %v1927 = vld [vmem:[#allocation3 + $0x70] sm:$0xff]
        %v1928 = vld [vmem:[#allocation3 + $0x78] sm:$0xff]
        %v1929 = vld [vmem:[#allocation3 + $0x80] sm:$0xff]
        %v1930 = vld [vmem:[#allocation3 + $0x88] sm:$0xff]
        %v1931 = vld [vmem:[#allocation3 + $0x90] sm:$0xff]
        %v1932 = vld [vmem:[#allocation3 + $0x98] sm:$0xff]
        %v1933 = vld [vmem:[#allocation3 + $0xa0] sm:$0xff]
        %v1934 = vld [vmem:[#allocation3 + $0xa8] sm:$0xff]
        %v1935 = vld [vmem:[#allocation3 + $0xb0] sm:$0xff]
        %v1936 = vld [vmem:[#allocation3 + $0xb8] sm:$0xff]
        %v1937 = vld [vmem:[#allocation3 + $0xc0] sm:$0xff]
        %v1938 = vld [vmem:[#allocation3 + $0xc8] sm:$0xff]
        %v1939 = vld [vmem:[#allocation3 + $0xd0] sm:$0xff]
        %v1940 = vld [vmem:[#allocation3 + $0xd8] sm:$0xff]
        %v1941 = vld [vmem:[#allocation3 + $0xe0] sm:$0xff]
        %v1942 = vld [vmem:[#allocation3 + $0xe8] sm:$0xff]
        %v1943 = vld [vmem:[#allocation3 + $0xf0] sm:$0xff]
        %v1944 = vld [vmem:[#allocation3 + $0xf8] sm:$0xff]
        %v1945 = vpack.c.bf16 %v1914, %v1913
        %v1946 = vpack.c.bf16 %v1916, %v1915
        %v1947 = vpack.c.bf16 %v1918, %v1917
        %v1948 = vpack.c.bf16 %v1920, %v1919
        %v1949 = vpack.c.bf16 %v1922, %v1921
        %v1950 = vpack.c.bf16 %v1924, %v1923
        %v1951 = vpack.c.bf16 %v1926, %v1925
        %v1952 = vpack.c.bf16 %v1928, %v1927
        %v1953 = vpack.c.bf16 %v1930, %v1929
        %v1954 = vpack.c.bf16 %v1932, %v1931
        %v1955 = vpack.c.bf16 %v1934, %v1933
        %v1956 = vpack.c.bf16 %v1936, %v1935
        %v1957 = vpack.c.bf16 %v1938, %v1937
        %v1958 = vpack.c.bf16 %v1940, %v1939
        %v1959 = vpack.c.bf16 %v1942, %v1941
        %v1960 = vpack.c.bf16 %v1944, %v1943
        %v1961 = vld [vmem:[%s1] sm:$0xf]
        %v1962 = vld [vmem:[%s1 + $0x4] sm:$0xf]
        %v1963 = vld [vmem:[%s1 + $0x8] sm:$0xf]
        %v1964 = vld [vmem:[%s1 + $0xc] sm:$0xf]
        %v1965 = vld [vmem:[%s1 + $0x10] sm:$0x3]
        %v1971 = vunpack.c.l.b16 %v1961
        %v1972 = vunpack.c.l.b16 %v1962
        %v1973 = vunpack.c.l.b16 %v1963
        %v1974 = vunpack.c.l.b16 %v1964
        %v1975 = vunpack.c.l.b16 %v1965
        %v1976 = vpack.c.b16 %v1972, %v1971
        %v1977 = vpack.c.b16 %v1974, %v1973
        %v1978 = vpack.c.b16 %v1975, %v1975
        %vm1981 = vcmask 293888
        %v1983 = vsel %vm1981, %v1945, 0
        %v1986 = vsel %vm1981, %v1946, 0
        %v1989 = vsel %vm1981, %v1947, 0
        %v1992 = vsel %vm1981, %v1948, 0
        %v1995 = vsel %vm1981, %v1949, 0
        %v1998 = vsel %vm1981, %v1950, 0
        %v2001 = vsel %vm1981, %v1951, 0
        %v2004 = vsel %vm1981, %v1952, 0
        %v2007 = vsel %vm1981, %v1953, 0
        %v2010 = vsel %vm1981, %v1954, 0
        %v2013 = vsel %vm1981, %v1955, 0
        %v2016 = vsel %vm1981, %v1956, 0
        %v2019 = vsel %vm1981, %v1957, 0
        %v2022 = vsel %vm1981, %v1958, 0
        %v2025 = vsel %vm1981, %v1959, 0
        %v2028 = vsel %vm1981, %v1960, 0
        %vm2030 = vcmask 1041408
        %v2032 = vsel %vm2030, %v1978, 0
        %2034 = vmatprep.subr.bf16.mxu0 0
        %2035 = vmatpush1.bf16.msra.mxu0 %v1976
        %2036 = vmatprep.subr.bf16.mxu0 0
        %2037 = vmatpush1.bf16.msra.mxu0 %v1977
        %2038 = vmatprep.subr.bf16.mxu0 0
        %2039 = vmatpush1.bf16.msra.mxu0 %v2032
        %2040 = vmatprep.subr.bf16.mxu0 0
        %2041 = vmatpush1.bf16.msra.mxu0 0
        %2042 = vmatprep.subr.bf16.mxu0 0
        %2043 = vmatpush1.bf16.msra.mxu0 0
        %2044 = vmatprep.subr.bf16.mxu0 0
        %2045 = vmatpush1.bf16.msra.mxu0 0
        %2046 = vmatprep.subr.bf16.mxu0 0
        %2047 = vmatpush1.bf16.msra.mxu0 0
        %2048 = vmatprep.subr.bf16.mxu0 0
        %2049 = vmatpush1.bf16.msra.mxu0 0
        %2050 = vmatprep.subr.bf16.mxu0 0
        %2051 = vmatpush1.bf16.msra.mxu0 0
        %2052 = vmatprep.subr.bf16.mxu0 0
        %2053 = vmatpush1.bf16.msra.mxu0 0
        %2054 = vmatprep.subr.bf16.mxu0 0
        %2055 = vmatpush1.bf16.msra.mxu0 0
        %2056 = vmatprep.subr.bf16.mxu0 0
        %2057 = vmatpush1.bf16.msra.mxu0 0
        %2058 = vmatprep.subr.bf16.mxu0 0
        %2059 = vmatpush1.bf16.msra.mxu0 0
        %2060 = vmatprep.subr.bf16.mxu0 0
        %2061 = vmatpush1.bf16.msra.mxu0 0
        %2062 = vmatprep.subr.bf16.mxu0 0
        %2063 = vmatpush1.bf16.msra.mxu0 0
        %2064 = vmatprep.subr.bf16.mxu0 0
        %2065 = vmatpush1.bf16.msra.mxu0 0
        %2066 = vmatprep.mubr.bf16.mxu0 0
        %2067 = vmatmul.mubr.bf16.gmra.mrb[0].mxu0 %v1983
        %v2068 = vpop.f32.mrb[0].mxu0
        %v2069 = vadd.f32 0.0, %v2068
        %v2070 = vpop.f32.mrb[0].mxu0
        %v2071 = vpop.f32.mrb[0].mxu0
        %v2072 = vadd.f32 0.0, %v2071
        %v2073 = vpop.f32.mrb[0].mxu0
        %2074 = vmatprep.mubr.bf16.mxu0 0
        %2075 = vmatmul.mubr.bf16.gmra.mrb[0].mxu0 %v1986
        %v2076 = vpop.f32.mrb[0].mxu0
        %v2077 = vadd.f32 0.0, %v2076
        %v2078 = vpop.f32.mrb[0].mxu0
        %v2079 = vpop.f32.mrb[0].mxu0
        %v2080 = vadd.f32 0.0, %v2079
        %v2081 = vpop.f32.mrb[0].mxu0
        %2082 = vmatprep.mubr.bf16.mxu0 0
        %2083 = vmatmul.mubr.bf16.gmra.mrb[0].mxu0 %v1989
        %v2084 = vpop.f32.mrb[0].mxu0
        %v2085 = vadd.f32 0.0, %v2084
        %v2086 = vpop.f32.mrb[0].mxu0
        %v2087 = vpop.f32.mrb[0].mxu0
        %v2088 = vadd.f32 0.0, %v2087
        %v2089 = vpop.f32.mrb[0].mxu0
        %2090 = vmatprep.mubr.bf16.mxu0 0
        %2091 = vmatmul.mubr.bf16.gmra.mrb[0].mxu0 %v1992
        %v2092 = vpop.f32.mrb[0].mxu0
        %v2093 = vadd.f32 0.0, %v2092
        %v2094 = vpop.f32.mrb[0].mxu0
        %v2095 = vpop.f32.mrb[0].mxu0
        %v2096 = vadd.f32 0.0, %v2095
        %v2097 = vpop.f32.mrb[0].mxu0
        %2098 = vmatprep.mubr.bf16.mxu0 0
        %2099 = vmatmul.mubr.bf16.gmra.mrb[0].mxu0 %v1995
        %v2100 = vpop.f32.mrb[0].mxu0
        %v2101 = vadd.f32 0.0, %v2100
        %v2102 = vpop.f32.mrb[0].mxu0
        %v2103 = vpop.f32.mrb[0].mxu0
        %v2104 = vadd.f32 0.0, %v2103
        %v2105 = vpop.f32.mrb[0].mxu0
        %2106 = vmatprep.mubr.bf16.mxu0 0
        %2107 = vmatmul.mubr.bf16.gmra.mrb[0].mxu0 %v1998
        %v2108 = vpop.f32.mrb[0].mxu0
        %v2109 = vadd.f32 0.0, %v2108
        %v2110 = vpop.f32.mrb[0].mxu0
        %v2111 = vpop.f32.mrb[0].mxu0
        %v2112 = vadd.f32 0.0, %v2111
        %v2113 = vpop.f32.mrb[0].mxu0
        %2114 = vmatprep.mubr.bf16.mxu0 0
        %2115 = vmatmul.mubr.bf16.gmra.mrb[0].mxu0 %v2001
        %v2116 = vpop.f32.mrb[0].mxu0
        %v2117 = vadd.f32 0.0, %v2116
        %v2118 = vpop.f32.mrb[0].mxu0
        %v2119 = vpop.f32.mrb[0].mxu0
        %v2120 = vadd.f32 0.0, %v2119
        %v2121 = vpop.f32.mrb[0].mxu0
        %2122 = vmatprep.mubr.bf16.mxu0 0
        %2123 = vmatmul.mubr.bf16.gmra.mrb[0].mxu0 %v2004
        %v2124 = vpop.f32.mrb[0].mxu0
        %v2125 = vadd.f32 0.0, %v2124
        %v2126 = vpop.f32.mrb[0].mxu0
        %v2127 = vpop.f32.mrb[0].mxu0
        %v2128 = vadd.f32 0.0, %v2127
        %v2129 = vpop.f32.mrb[0].mxu0
        %2130 = vmatprep.mubr.bf16.mxu0 0
        %2131 = vmatmul.mubr.bf16.gmra.mrb[0].mxu0 %v2007
        %v2132 = vpop.f32.mrb[0].mxu0
        %v2133 = vadd.f32 0.0, %v2132
        %v2134 = vpop.f32.mrb[0].mxu0
        %v2135 = vpop.f32.mrb[0].mxu0
        %v2136 = vadd.f32 0.0, %v2135
        %v2137 = vpop.f32.mrb[0].mxu0
        %2138 = vmatprep.mubr.bf16.mxu0 0
        %2139 = vmatmul.mubr.bf16.gmra.mrb[0].mxu0 %v2010
        %v2140 = vpop.f32.mrb[0].mxu0
        %v2141 = vadd.f32 0.0, %v2140
        %v2142 = vpop.f32.mrb[0].mxu0
        %v2143 = vpop.f32.mrb[0].mxu0
        %v2144 = vadd.f32 0.0, %v2143
        %v2145 = vpop.f32.mrb[0].mxu0
        %2146 = vmatprep.mubr.bf16.mxu0 0
        %2147 = vmatmul.mubr.bf16.gmra.mrb[0].mxu0 %v2013
        %v2148 = vpop.f32.mrb[0].mxu0
        %v2149 = vadd.f32 0.0, %v2148
        %v2150 = vpop.f32.mrb[0].mxu0
        %v2151 = vpop.f32.mrb[0].mxu0
        %v2152 = vadd.f32 0.0, %v2151
        %v2153 = vpop.f32.mrb[0].mxu0
        %2154 = vmatprep.mubr.bf16.mxu0 0
        %2155 = vmatmul.mubr.bf16.gmra.mrb[0].mxu0 %v2016
        %v2156 = vpop.f32.mrb[0].mxu0
        %v2157 = vadd.f32 0.0, %v2156
        %v2158 = vpop.f32.mrb[0].mxu0
        %v2159 = vpop.f32.mrb[0].mxu0
        %v2160 = vadd.f32 0.0, %v2159
        %v2161 = vpop.f32.mrb[0].mxu0
        %2162 = vmatprep.mubr.bf16.mxu0 0
        %2163 = vmatmul.mubr.bf16.gmra.mrb[0].mxu0 %v2019
        %v2164 = vpop.f32.mrb[0].mxu0
        %v2165 = vadd.f32 0.0, %v2164
        %v2166 = vpop.f32.mrb[0].mxu0
        %v2167 = vpop.f32.mrb[0].mxu0
        %v2168 = vadd.f32 0.0, %v2167
        %v2169 = vpop.f32.mrb[0].mxu0
        %2170 = vmatprep.mubr.bf16.mxu0 0
        %2171 = vmatmul.mubr.bf16.gmra.mrb[0].mxu0 %v2022
        %v2172 = vpop.f32.mrb[0].mxu0
        %v2173 = vadd.f32 0.0, %v2172
        %v2174 = vpop.f32.mrb[0].mxu0
        %v2175 = vpop.f32.mrb[0].mxu0
        %v2176 = vadd.f32 0.0, %v2175
        %v2177 = vpop.f32.mrb[0].mxu0
        %2178 = vmatprep.mubr.bf16.mxu0 0
        %2179 = vmatmul.mubr.bf16.gmra.mrb[0].mxu0 %v2025
        %v2180 = vpop.f32.mrb[0].mxu0
        %v2181 = vadd.f32 0.0, %v2180
        %v2182 = vpop.f32.mrb[0].mxu0
        %v2183 = vpop.f32.mrb[0].mxu0
        %v2184 = vadd.f32 0.0, %v2183
        %v2185 = vpop.f32.mrb[0].mxu0
        %2186 = vmatprep.mubr.bf16.mxu0 0
        %2187 = vmatmul.mubr.bf16.gmra.mrb[0].mxu0 %v2028
        %v2188 = vpop.f32.mrb[0].mxu0
        %v2189 = vadd.f32 0.0, %v2188
        %v2190 = vpop.f32.mrb[0].mxu0
        %v2191 = vpop.f32.mrb[0].mxu0
        %v2192 = vadd.f32 0.0, %v2191
        %v2193 = vpop.f32.mrb[0].mxu0
        %2194 = vdwg.mxu0
        %v2195 = vld [vmem:[%s2] sm:$0x1]
        %v2197 = vlaneseq
        %v2198 = vshrl.u32 %v2197, 7
        %v2199 = vsub.s32 0, %v2198
        %v2200 = vrot.slane %v2195, %v2199
        %v2202 = vmul.f32 %v2069, %v2200
        %v2203 = vmul.f32 %v2072, %v2200
        %v2204 = vmul.f32 %v2077, %v2200
        %v2205 = vmul.f32 %v2080, %v2200
        %v2206 = vmul.f32 %v2085, %v2200
        %v2207 = vmul.f32 %v2088, %v2200
        %v2208 = vmul.f32 %v2093, %v2200
        %v2209 = vmul.f32 %v2096, %v2200
        %v2210 = vmul.f32 %v2101, %v2200
        %v2211 = vmul.f32 %v2104, %v2200
        %v2212 = vmul.f32 %v2109, %v2200
        %v2213 = vmul.f32 %v2112, %v2200
        %v2214 = vmul.f32 %v2117, %v2200
        %v2215 = vmul.f32 %v2120, %v2200
        %v2216 = vmul.f32 %v2125, %v2200
        %v2217 = vmul.f32 %v2128, %v2200
        %v2218 = vmul.f32 %v2133, %v2200
        %v2219 = vmul.f32 %v2136, %v2200
        %v2220 = vmul.f32 %v2141, %v2200
        %v2221 = vmul.f32 %v2144, %v2200
        %v2222 = vmul.f32 %v2149, %v2200
        %v2223 = vmul.f32 %v2152, %v2200
        %v2224 = vmul.f32 %v2157, %v2200
        %v2225 = vmul.f32 %v2160, %v2200
        %v2226 = vmul.f32 %v2165, %v2200
        %v2227 = vmul.f32 %v2168, %v2200
        %v2228 = vmul.f32 %v2173, %v2200
        %v2229 = vmul.f32 %v2176, %v2200
        %v2230 = vmul.f32 %v2181, %v2200
        %v2231 = vmul.f32 %v2184, %v2200
        %v2232 = vmul.f32 %v2189, %v2200
        %v2233 = vmul.f32 %v2192, %v2200
        %v2234 = vld [vmem:[%s3] sm:$0x1]
        %v2236 = vlaneseq
        %v2237 = vshrl.u32 %v2236, 7
        %v2238 = vsub.s32 0, %v2237
        %v2239 = vrot.slane %v2234, %v2238
        %v2241 = vadd.f32 %v2202, %v2239
        %v2242 = vadd.f32 %v2203, %v2239
        %v2243 = vadd.f32 %v2204, %v2239
        %v2244 = vadd.f32 %v2205, %v2239
        %v2245 = vadd.f32 %v2206, %v2239
        %v2246 = vadd.f32 %v2207, %v2239
        %v2247 = vadd.f32 %v2208, %v2239
        %v2248 = vadd.f32 %v2209, %v2239
        %v2249 = vadd.f32 %v2210, %v2239
        %v2250 = vadd.f32 %v2211, %v2239
        %v2251 = vadd.f32 %v2212, %v2239
        %v2252 = vadd.f32 %v2213, %v2239
        %v2253 = vadd.f32 %v2214, %v2239
        %v2254 = vadd.f32 %v2215, %v2239
        %v2255 = vadd.f32 %v2216, %v2239
        %v2256 = vadd.f32 %v2217, %v2239
        %v2257 = vadd.f32 %v2218, %v2239
        %v2258 = vadd.f32 %v2219, %v2239
        %v2259 = vadd.f32 %v2220, %v2239
        %v2260 = vadd.f32 %v2221, %v2239
        %v2261 = vadd.f32 %v2222, %v2239
        %v2262 = vadd.f32 %v2223, %v2239
        %v2263 = vadd.f32 %v2224, %v2239
        %v2264 = vadd.f32 %v2225, %v2239
        %v2265 = vadd.f32 %v2226, %v2239
        %v2266 = vadd.f32 %v2227, %v2239
        %v2267 = vadd.f32 %v2228, %v2239
        %v2268 = vadd.f32 %v2229, %v2239
        %v2269 = vadd.f32 %v2230, %v2239
        %v2270 = vadd.f32 %v2231, %v2239
        %v2271 = vadd.f32 %v2232, %v2239
        %v2272 = vadd.f32 %v2233, %v2239
        %v2273 = vmax.f32 %v2241, 0.0
        %v2274 = vmax.f32 %v2242, 0.0
        %v2275 = vmax.f32 %v2243, 0.0
        %v2276 = vmax.f32 %v2244, 0.0
        %v2277 = vmax.f32 %v2245, 0.0
        %v2278 = vmax.f32 %v2246, 0.0
        %v2279 = vmax.f32 %v2247, 0.0
        %v2280 = vmax.f32 %v2248, 0.0
        %v2281 = vmax.f32 %v2249, 0.0
        %v2282 = vmax.f32 %v2250, 0.0
        %v2283 = vmax.f32 %v2251, 0.0
        %v2284 = vmax.f32 %v2252, 0.0
        %v2285 = vmax.f32 %v2253, 0.0
        %v2286 = vmax.f32 %v2254, 0.0
        %v2287 = vmax.f32 %v2255, 0.0
        %v2288 = vmax.f32 %v2256, 0.0
        %v2289 = vmax.f32 %v2257, 0.0
        %v2290 = vmax.f32 %v2258, 0.0
        %v2291 = vmax.f32 %v2259, 0.0
        %v2292 = vmax.f32 %v2260, 0.0
        %v2293 = vmax.f32 %v2261, 0.0
        %v2294 = vmax.f32 %v2262, 0.0
        %v2295 = vmax.f32 %v2263, 0.0
        %v2296 = vmax.f32 %v2264, 0.0
        %v2297 = vmax.f32 %v2265, 0.0
        %v2298 = vmax.f32 %v2266, 0.0
        %v2299 = vmax.f32 %v2267, 0.0
        %v2300 = vmax.f32 %v2268, 0.0
        %v2301 = vmax.f32 %v2269, 0.0
        %v2302 = vmax.f32 %v2270, 0.0
        %v2303 = vmax.f32 %v2271, 0.0
        %v2304 = vmax.f32 %v2272, 0.0
        %2305 = vst [vmem:[%s190] sm:$0xff] %v2273
        %2306 = vst [vmem:[%s190 + $0x8] sm:$0xff] %v2274
        %2307 = vst [vmem:[%s190 + $0x10] sm:$0xff] %v2275
        %2308 = vst [vmem:[%s190 + $0x18] sm:$0xff] %v2276
        %2309 = vst [vmem:[%s190 + $0x20] sm:$0xff] %v2277
        %2310 = vst [vmem:[%s190 + $0x28] sm:$0xff] %v2278
        %2311 = vst [vmem:[%s190 + $0x30] sm:$0xff] %v2279
        %2312 = vst [vmem:[%s190 + $0x38] sm:$0xff] %v2280
        %2313 = vst [vmem:[%s190 + $0x40] sm:$0xff] %v2281
        %2314 = vst [vmem:[%s190 + $0x48] sm:$0xff] %v2282
        %2315 = vst [vmem:[%s190 + $0x50] sm:$0xff] %v2283
        %2316 = vst [vmem:[%s190 + $0x58] sm:$0xff] %v2284
        %2317 = vst [vmem:[%s190 + $0x60] sm:$0xff] %v2285
        %2318 = vst [vmem:[%s190 + $0x68] sm:$0xff] %v2286
        %2319 = vst [vmem:[%s190 + $0x70] sm:$0xff] %v2287
        %2320 = vst [vmem:[%s190 + $0x78] sm:$0xff] %v2288
        %2321 = vst [vmem:[%s190 + $0x80] sm:$0xff] %v2289
        %2322 = vst [vmem:[%s190 + $0x88] sm:$0xff] %v2290
        %2323 = vst [vmem:[%s190 + $0x90] sm:$0xff] %v2291
        %2324 = vst [vmem:[%s190 + $0x98] sm:$0xff] %v2292
        %2325 = vst [vmem:[%s190 + $0xa0] sm:$0xff] %v2293
        %2326 = vst [vmem:[%s190 + $0xa8] sm:$0xff] %v2294
        %2327 = vst [vmem:[%s190 + $0xb0] sm:$0xff] %v2295
        %2328 = vst [vmem:[%s190 + $0xb8] sm:$0xff] %v2296
        %2329 = vst [vmem:[%s190 + $0xc0] sm:$0xff] %v2297
        %2330 = vst [vmem:[%s190 + $0xc8] sm:$0xff] %v2298
        %2331 = vst [vmem:[%s190 + $0xd0] sm:$0xff] %v2299
        %2332 = vst [vmem:[%s190 + $0xd8] sm:$0xff] %v2300
        %2333 = vst [vmem:[%s190 + $0xe0] sm:$0xff] %v2301
        %2334 = vst [vmem:[%s190 + $0xe8] sm:$0xff] %v2302
        %2335 = vst [vmem:[%s190 + $0xf0] sm:$0xff] %v2303
        %2336 = vst [vmem:[%s190 + $0xf8] sm:$0xff] %v2304
        %s2337 = sand.u32 %s115, 1
        %s2338 = scalar_lea.sflag [#allocation5], %s2337
        %s2339 = sand.u32 %s115, 1
        %s2340 = smul.addr %s2339, 256
        %s2341 = scalar_lea.vmem [#allocation4], %s2340
        // Predicated region
        $region37: #{tpu_custom_call.1} parent=35 // pred_check
          %p2342 = pneg %p125
        $region38: #{tpu_custom_call.1} parent=35 // pred_check_branch
          %2344 = sbr.rel (%p2342) target = $region40
        $region39: #{tpu_custom_call.1} parent=35 // pred_region
          %s2346 = ssub.s32 4096, 4096
          %2347 = vsyncadd %s2338, %s2346
          %s2348 = smul.addr %s18, 32
          %s2349 = smul.addr %s2348, 128
          %s2350 = scalar_lea.hbm %s4, %s2349
          %s2351 = sshll.u32 %s2341, 4
          %s2352 = int_to_ptr.vmem [resolvable:$true] %s2351
          %2357 = dma.vmem_to_hbm [thread:$0]  %s2352, 4096, %s2350, %s2338, 128, 128, 8
        $region40: #{tpu_custom_call.1} parent=35 // pred_fallthru
          _
      $region36: #{tpu_custom_call.1} parent=5 // pred_fallthru
        _
      %p2358 = scmp.le.s32.totalorder 2, %s13
      // Predicated region
      $region41: #{tpu_custom_call.1} parent=5 // pred_check
        %p2359 = pneg %p2358
      $region42: #{tpu_custom_call.1} parent=5 // pred_check_branch
        %2361 = sbr.rel (%p2359) target = $region44
      $region43: #{tpu_custom_call.1} parent=5 // pred_region
        %s2362 = ssub.s32 %s13, 2
        // Predicated region
        $region45: #{tpu_custom_call.1} parent=43 // pred_check
          %p2363 = pneg %p131
        $region46: #{tpu_custom_call.1} parent=43 // pred_check_branch
          %2365 = sbr.rel (%p2363) target = $region48
        $region47: #{tpu_custom_call.1} parent=43 // pred_region
          %s2366 = sand.u32 %s116, 1
          %s2367 = scalar_lea.sflag [#allocation5], %s2366
          %s2368 = sand.u32 %s116, 1
          %s2369 = smul.addr %s2368, 256
          %s2370 = scalar_lea.vmem [#allocation4], %s2369
          %2371 = dma.done %s2367, 4096
        $region48: #{tpu_custom_call.1} parent=43 // pred_fallthru
          _
      $region44: #{tpu_custom_call.1} parent=5 // pred_fallthru
        _
    $region6: #{tpu_custom_call.1} parent=1 // loop_footer
      %s17 = sadd.s32 1, %s13
    $region7: #{tpu_custom_call.1} parent=1 // loop_footer_branch
      %12 = sbr.rel target = $region3
    $region8: #{tpu_custom_call.1} parent=1 // loop_exit
      _
    %2372 = vsyncpa [#allocation5], 1
    %s2373 = scalar_lea.sflag [#allocation5], 1
    %2374 = vsyncpa %s2373, 1

</llo_original>
